<compile_context>
chip_gen: v6e
topology: v6e:2x2x1
jax: 0.10.0
libtpu: 0.0.40
codegen_flags: <defaults>
</compile_context>

<pallas_src>
import functools

import jax
import jax.numpy as jnp
from jax.experimental import pallas as pl
from jax.experimental.pallas import tpu as pltpu

_LANES = 128
_MAX_BLOCK_F32_BYTES = 2 << 20      # f32 working-set cap per block (~2 MiB)
_MIN_PALLAS_ELEMENTS = 1 << 16      # below this, a standalone pallas_call is pure overhead
_VMEM_LIMIT_BYTES = 32 << 20        # safe on v5e/v6e (128 MiB) and v7x (64 MiB)


def _round_up(x, m):
    return ((x + m - 1) // m) * m


def _grouped_argmax_kernel(q_ref, out_ref, *, acts):
    """Per-group argmax along the lane axis.

    q_ref  : [TILE, 128] native dtype; each 128-lane row holds 128//acts
             contiguous groups of `acts` Q-values (row-major view of [rows, acts]).
    out_ref: [TILE, 128//acts] int32; first-occurrence argmax per group.
    """
    lanes = q_ref.shape[-1]                       # 128
    groups = lanes // acts

    q = q_ref[...].astype(jnp.float32)            # in-kernel cast (v5e has no bf16 VPU)
    # torch/jnp argmax treat NaN as the maximum; remap NaN -> +inf so the max
    # tree below returns the first NaN index for rows containing NaN.
    q = jnp.where(jnp.isnan(q), jnp.inf, q)

    lane = jax.lax.broadcasted_iota(jnp.int32, q.shape, 1)
    idx = (lane & (acts - 1)).astype(jnp.float32)            # within-group index
    idx_next = ((lane + 1) & (acts - 1)).astype(jnp.float32)  # == roll(idx, -1)

    # Segmented argmax with a log2(acts) roll tree (ascending shifts 1,2,4,...).
    # On every combine feeding a group-leader lane the "hi" operand covers
    # strictly larger original indices, so keeping "lo" on ties yields exact
    # first-occurrence argmax. Cross-group contamination only reaches lanes the
    # leader chain never reads.
    val = q
    s = 1
    while s < acts:
        v_hi = pltpu.roll(val, lanes - s, axis=1)            # val[l] <- val[l + s]
        i_hi = idx_next if s == 1 else pltpu.roll(idx, lanes - s, axis=1)
        take_hi = v_hi > val                                 # strict: ties keep lo
        idx = jnp.where(take_hi, i_hi, idx)
        val = jnp.maximum(val, v_hi)
        s *= 2

    # Group-leader lanes (lane % acts == 0) now hold the argmax. Compact the
    # strided leader lanes to a dense [TILE, groups] slab on the idle MXU:
    # sel[l, g] = 1 iff l == g*acts, so dense[:, g] = idx[:, g*acts]. All values
    # are small integers -> exact at any matmul precision.
    sel = (jax.lax.broadcasted_iota(jnp.int32, (lanes, groups), 0)
           == jax.lax.broadcasted_iota(jnp.int32, (lanes, groups), 1) * acts
           ).astype(jnp.float32)
    dense = jnp.dot(idx, sel, preferred_element_type=jnp.float32)
    out_ref[...] = dense.astype(jnp.int32)


def _argmax_last_dim_2d(q2d):
    """q2d: [rows, num_actions] -> [rows] int32 argmax over the last dim."""
    rows, acts = q2d.shape

    pallas_ok = (2 <= acts <= _LANES) and (acts & (acts - 1)) == 0
    if (not pallas_ok) or rows * acts < _MIN_PALLAS_ELEMENTS:
        # Tiny batches are launch-overhead bound; non-power-of-two / >128 action
        # counts don't fit the lane-dense grouping. XLA's fused argmax wins there.
        # TODO(synk): in production, fuse this argmax into the kernel that
        # produces q_values instead of a standalone call.
        return jnp.argmax(q2d, axis=-1).astype(jnp.int32)

    groups = _LANES // acts
    pad = (-rows) % groups
    if pad:
        # Rare (rows not a multiple of 128//acts): one extra pass over the input.
        q2d = jnp.pad(q2d, ((0, pad), (0, 0)))
    rows_g = (rows + pad) // groups

    # Free row-major view: [rows_p, acts] -> [rows_g, 128]. No transpose, no
    # layout copy; each 128-lane row holds `groups` complete examples.
    qv = q2d.reshape(rows_g, _LANES)

    # Block sizing: cap the per-block f32 working set, keep >= 2 grid steps so
    # the "parallel" axis can shard across v7x's two TensorCores, stay
    # sublane (8) aligned.
    cap = _MAX_BLOCK_F32_BYTES // (_LANES * 4)
    tile = max(8, min(cap,
                      _round_up(pl.cdiv(rows_g, 2), 8),
                      _round_up(rows_g, 8)))
    nblk = pl.cdiv(rows_g, tile)

    out = pl.pallas_call(
        functools.partial(_grouped_argmax_kernel, acts=acts),
        out_shape=jax.ShapeDtypeStruct((nblk * tile, groups), jnp.int32),
        grid=(nblk,),
        in_specs=[pl.BlockSpec((tile, _LANES), lambda i: (i, 0))],
        out_specs=pl.BlockSpec((tile, groups), lambda i: (i, 0)),
        compiler_params=pltpu.CompilerParams(
            dimension_semantics=("parallel",),
            vmem_limit_bytes=_VMEM_LIMIT_BYTES),
    )(qv)

    # Row-major flatten restores original example order; drop pad rows and the
    # unspecified tail of the ragged last block.
    return out.reshape(-1)[:rows]


def action_multi_dim_adapter(q_values):
    """Pallas equivalent of ActionMultiDimAdapter.forward.

    q_values: [B, A] or [B, 2, A]
    returns:  [B] int32 or [B, 2] int32 (stacked version of the PyTorch list).
    """
    if q_values.ndim == 2:
        return _argmax_last_dim_2d(q_values)
    if q_values.ndim == 3:
        b, k, a = q_values.shape
        return _argmax_last_dim_2d(q_values.reshape(b * k, a)).reshape(b, k)
    raise ValueError("q_values must be rank 2 or rank 3")


if __name__ == "__main__":
    key = jax.random.PRNGKey(0)
    ks = jax.random.split(key, 6)

    def check(q):
        got = jax.block_until_ready(action_multi_dim_adapter(q))
        ref = jnp.argmax(q, axis=-1).astype(jnp.int32)
        assert got.shape == ref.shape, (got.shape, ref.shape)
        assert bool(jnp.array_equal(got, ref)), "argmax mismatch"
        return got

    # 1) tiny [batch, num_actions] (fast path)
    check(jax.random.normal(ks[0], (2, 8), dtype=jnp.float32))
    # 2) tiny [batch, 2, num_actions] (fast path)
    check(jax.random.normal(ks[1], (2, 2, 8), dtype=jnp.float32))
    # 3) Pallas path: multi-step parallel grid, f32
    check(jax.random.normal(ks[2], (16384, 8), dtype=jnp.float32))
    # 4) Pallas path with heavy ties (first-occurrence tie-break)
    check(jnp.round(jax.random.normal(ks[3], (16384, 8), dtype=jnp.float32)))
    # 5) Pallas path, bf16, rank-3 (native-dtype DMA, in-kernel f32 compare)
    check(jax.random.normal(ks[4], (8192, 2, 8), dtype=jnp.bfloat16))
    # 6) Pallas path, rows not a multiple of 128//acts, acts=4 (ragged + pad)
    check(jax.random.normal(ks[5], (16390, 4), dtype=jnp.float32))

    print("KERNEL_OK")
</pallas_src>

<mosaic_0001>
module attributes {stable_mosaic.version = 11 : i64} {
  func.func @_grouped_argmax_kernel(%arg0: i32, %arg1: memref<512x128xf32, #tpu.memory_space<vmem>>, %arg2: memref<512x16xi32, #tpu.memory_space<vmem>>) attributes {dimension_semantics = [#tpu.dimension_semantics<parallel>], iteration_bounds = array<i64: 2>, scalar_prefetch = 0 : i64, scratch_operands = 0 : i64, tpu.core_type = #tpu.core_type<tc>, window_params = [{transform_indices = @transform_0, window_bounds = array<i64: 512, 128>}, {transform_indices = @transform_1, window_bounds = array<i64: 512, 16>}]} {
    %c0 = arith.constant 0 : index
    %c0_0 = arith.constant 0 : index
    %0 = vector.load %arg1[%c0, %c0_0] : memref<512x128xf32, #tpu.memory_space<vmem>>, vector<512x128xf32>
    %1 = arith.cmpf one, %0, %0 : vector<512x128xf32>
    %cst = arith.constant 0x7F800000 : f32
    %2 = vector.broadcast %cst : f32 to vector<512x128xf32>
    %3 = arith.select %1, %2, %0 : vector<512x128xi1>, vector<512x128xf32>
    %4 = tpu.iota {dimensions = array<i32: 1>} : vector<512x128xi32>
    %c7_i32 = arith.constant 7 : i32
    %5 = vector.broadcast %c7_i32 : i32 to vector<512x128xi32>
    %6 = arith.andi %4, %5 : vector<512x128xi32>
    %7 = arith.sitofp %6 : vector<512x128xi32> to vector<512x128xf32>
    %c1_i32 = arith.constant 1 : i32
    %8 = vector.broadcast %c1_i32 : i32 to vector<512x128xi32>
    %9 = arith.addi %4, %8 : vector<512x128xi32>
    %c7_i32_1 = arith.constant 7 : i32
    %10 = vector.broadcast %c7_i32_1 : i32 to vector<512x128xi32>
    %11 = arith.andi %9, %10 : vector<512x128xi32>
    %12 = arith.sitofp %11 : vector<512x128xi32> to vector<512x128xf32>
    %c127_i32 = arith.constant 127 : i32
    %13 = tpu.dynamic_rotate %3 by %c127_i32 dim 1 : vector<512x128xf32>, i32 -> vector<512x128xf32>
    %14 = arith.cmpf ogt, %13, %3 : vector<512x128xf32>
    %15 = arith.select %14, %12, %7 : vector<512x128xi1>, vector<512x128xf32>
    %16 = arith.maximumf %3, %13 : vector<512x128xf32>
    %c126_i32 = arith.constant 126 : i32
    %17 = tpu.dynamic_rotate %16 by %c126_i32 dim 1 : vector<512x128xf32>, i32 -> vector<512x128xf32>
    %c126_i32_2 = arith.constant 126 : i32
    %18 = tpu.dynamic_rotate %15 by %c126_i32_2 dim 1 : vector<512x128xf32>, i32 -> vector<512x128xf32>
    %19 = arith.cmpf ogt, %17, %16 : vector<512x128xf32>
    %20 = arith.select %19, %18, %15 : vector<512x128xi1>, vector<512x128xf32>
    %21 = arith.maximumf %16, %17 : vector<512x128xf32>
    %c124_i32 = arith.constant 124 : i32
    %22 = tpu.dynamic_rotate %21 by %c124_i32 dim 1 : vector<512x128xf32>, i32 -> vector<512x128xf32>
    %c124_i32_3 = arith.constant 124 : i32
    %23 = tpu.dynamic_rotate %20 by %c124_i32_3 dim 1 : vector<512x128xf32>, i32 -> vector<512x128xf32>
    %24 = arith.cmpf ogt, %22, %21 : vector<512x128xf32>
    %25 = arith.select %24, %23, %20 : vector<512x128xi1>, vector<512x128xf32>
    %26 = tpu.iota {dimensions = array<i32: 0>} : vector<128x16xi32>
    %27 = tpu.iota {dimensions = array<i32: 1>} : vector<128x16xi32>
    %c8_i32 = arith.constant 8 : i32
    %28 = vector.broadcast %c8_i32 : i32 to vector<128x16xi32>
    %29 = arith.muli %27, %28 : vector<128x16xi32>
    %30 = arith.cmpi eq, %26, %29 : vector<128x16xi32>
    %31 = arith.extui %30 : vector<128x16xi1> to vector<128x16xi32>
    %32 = arith.sitofp %31 : vector<128x16xi32> to vector<128x16xf32>
    %cst_4 = arith.constant dense<0.000000e+00> : vector<512x16xf32>
    %33 = tpu.matmul %25, %32, %cst_4 {dimension_numbers = #tpu.dot_dimension_numbers<[1], [0], [0], [1], [0, 0, 1, 1], [], []>} : vector<512x128xf32>, vector<128x16xf32>, vector<512x16xf32> -> vector<512x16xf32>
    %34 = arith.fptosi %33 : vector<512x16xf32> to vector<512x16xi32>
    %c0_5 = arith.constant 0 : index
    %c0_6 = arith.constant 0 : index
    %35 = vector.load %arg2[%c0_5, %c0_6] : memref<512x16xi32, #tpu.memory_space<vmem>>, vector<512x16xi32>
    tpu.vector_store %arg2[%c0_5, %c0_6], %34 {strides = array<i32>} : memref<512x16xi32, #tpu.memory_space<vmem>>, vector<512x16xi32>,
    return
  }
  func.func @transform_0(%arg0: i32) -> (i32, i32) {
    %c0_i32 = arith.constant 0 : i32
    %c0_i32_0 = arith.constant 0 : i32
    return %arg0, %c0_i32 : i32, i32
  }
  func.func @transform_1(%arg0: i32) -> (i32, i32) {
    %c0_i32 = arith.constant 0 : i32
    %c0_i32_0 = arith.constant 0 : i32
    return %arg0, %c0_i32 : i32, i32
  }
}

</mosaic_0001>

<llo_original>
// kernel: tpu_custom_call.1
$region0: #{tpu_custom_call.1}
  #allocation0 [shape = 'u32[]', space=smem, size = 0x4, offset = 0x4, fixed_abs, tag = 'smem constant byte address 0x4 - core index']
  #allocation1 [shape = 'u32[144,128]{1,0:T(1,128)}', space=vmem, size = 0x12000, scoped, tag = 'internal scratch']
  %s0 = inlined_call_operand.hbm [shape: f32[1024,128], index: 0, kind: input, shape index: {}]
  %s1 = inlined_call_operand.vmem [shape: s32[1024,16], index: 1, kind: output, shape index: {}]
  %s2 = sld [smem:[#allocation0]]
  $region41: #{tpu_custom_call.1} parent=0
    _
  %s4 = ssub.s32 1, %s2
  %s5 = scalar_select 0, %s4, %s2
  $region1: #{tpu_custom_call.1} parent=0
    #allocation2 [shape = 'u8[524288]{0}', space=vmem, size = 0x80000, scoped, tag = 'input window, operand 0']
    #allocation3 [shape = 's32[2]{0}', space=sflag, size = 0x8, scoped, tag = 'scoped memory for tpu_custom_call.1']
    %6 = vsyncpa [#allocation3], 0
    %s7 = scalar_lea.sflag [#allocation3], 1
    %8 = vsyncpa %s7, 0
    loop: start=0, step=1, limit=4
    $region2: #{tpu_custom_call.1} parent=1 // loop_pre_header
      _
    $region3: #{tpu_custom_call.1} parent=1 // loop_header
      %s10 = sphi 0, %s14
      %p11 = scmp.ge.s32.totalorder %s10, 4
      %s20 = sphi 0, %s22
      %s23 = sphi 0, %s20
      %s24 = sphi 0, %s23
      %s40 = sphi 0, %s24
      %s46 = sphi 0, %s48
      %s49 = sphi 0, %s46
      %s50 = sphi 0, %s49
      %s66 = sphi 0, %s50
    $region4: #{tpu_custom_call.1} parent=1 // loop_header_branch
      %13 = sbr.rel (%p11) target = $region8
    $region5: #{tpu_custom_call.1} parent=1 // loop_body
      %s15 = ssub.s32 %s10, 1
      %s16 = ssub.s32 %s10, 2
      %s17 = sadd.s32 %s10, 1
      %s18 = ssub.s32 %s10, %s17
      %p19 = scmp.eq.s32.totalorder %s18, 0
      %s21 = sadd.s32 %s20, 1
      %s22 = scalar_select %p19, %s20, %s21
      %p25 = pneg %p19
      %p26 = scmp.eq.s32.totalorder %s10, 1
      %p27 = por %p25, %p26
      %p28 = scmp.ne.s32.totalorder %s20, %s23
      %p29 = scmp.eq.s32.totalorder %s10, 0
      %p30 = por %p28, %p29
      %p31 = scmp.ne.s32.totalorder %s20, %s23
      %p32 = scmp.eq.s32.totalorder %s15, 1
      %p33 = por %p31, %p32
      %p34 = scmp.ne.s32.totalorder %s23, %s24
      %p35 = scmp.eq.s32.totalorder %s15, 0
      %p36 = por %p34, %p35
      %p37 = scmp.ne.s32.totalorder %s23, %s24
      %p38 = scmp.eq.s32.totalorder %s16, 1
      %p39 = por %p37, %p38
      %p41 = scmp.ne.s32.totalorder %s24, %s40
      %p42 = scmp.eq.s32.totalorder %s16, 0
      %p43 = por %p41, %p42
      %s44 = ssub.s32 %s10, %s17
      %p45 = scmp.eq.s32.totalorder %s44, 0
      %s47 = sadd.s32 %s46, 1
      %s48 = scalar_select %p45, %s46, %s47
      %p51 = pneg %p45
      %p52 = scmp.eq.s32.totalorder %s10, 1
      %p53 = por %p51, %p52
      %p54 = scmp.ne.s32.totalorder %s46, %s49
      %p55 = scmp.eq.s32.totalorder %s10, 0
      %p56 = por %p54, %p55
      %p57 = scmp.ne.s32.totalorder %s46, %s49
      %p58 = scmp.eq.s32.totalorder %s15, 1
      %p59 = por %p57, %p58
      %p60 = scmp.ne.s32.totalorder %s49, %s50
      %p61 = scmp.eq.s32.totalorder %s15, 0
      %p62 = por %p60, %p61
      %p63 = scmp.ne.s32.totalorder %s49, %s50
      %p64 = scmp.eq.s32.totalorder %s16, 1
      %p65 = por %p63, %p64
      %p67 = scmp.ne.s32.totalorder %s50, %s66
      %p68 = scmp.eq.s32.totalorder %s16, 0
      %p69 = por %p67, %p68
      %p70 = scmp.le.s32.totalorder 1, %s10
      %p71 = scmp.lt.s32.totalorder %s10, 3
      %p72 = pnand %p70, %p71
      %p73 = pneg %p72
      // Predicated region
      $region9: #{tpu_custom_call.1} parent=5 // pred_check
        _
      $region10: #{tpu_custom_call.1} parent=5 // pred_check_branch
        %75 = sbr.rel (%p72) target = $region12
      $region11: #{tpu_custom_call.1} parent=5 // pred_region
        %s76 = ssub.s32 %s10, 1
      $region12: #{tpu_custom_call.1} parent=5 // pred_fallthru
        _
      %p77 = scmp.lt.s32.totalorder %s10, 2
      // Predicated region
      $region13: #{tpu_custom_call.1} parent=5 // pred_check
        %p78 = pneg %p77
      $region14: #{tpu_custom_call.1} parent=5 // pred_check_branch
        %80 = sbr.rel (%p78) target = $region16
      $region15: #{tpu_custom_call.1} parent=5 // pred_region
        // Predicated region
        $region17: #{tpu_custom_call.1} parent=15 // pred_check
          %p81 = pneg %p30
        $region18: #{tpu_custom_call.1} parent=15 // pred_check_branch
          %83 = sbr.rel (%p81) target = $region20
        $region19: #{tpu_custom_call.1} parent=15 // pred_region
          %s84 = sand.u32 %s20, 1
          %s85 = scalar_lea.sflag [#allocation3], %s84
          %s86 = sand.u32 %s20, 1
          %s87 = smul.addr %s86, 512
          %s88 = scalar_lea.vmem [#allocation2], %s87
          %s89 = smul.u32 64, %s10
          %s91 = ssub.s32 8192, 8192
          %92 = vsyncadd %s85, %s91
          %s93 = smul.addr %s89, 128
          %s94 = scalar_lea.hbm %s0, %s93
          %s95 = sshll.u32 %s88, 4
          %s96 = int_to_ptr.vmem [resolvable:$true] %s95
          %101 = dma.hbm_to_vmem [thread:$0]  %s94, 8192, %s96, %s85, 128, 128, 8
        $region20: #{tpu_custom_call.1} parent=15 // pred_fallthru
          _
      $region16: #{tpu_custom_call.1} parent=5 // pred_fallthru
        _
      %p102 = scmp.le.s32.totalorder 1, %s10
      %p103 = scmp.lt.s32.totalorder %s10, 3
      %p104 = pnand %p102, %p103
      %p105 = pneg %p104
      // Predicated region
      $region21: #{tpu_custom_call.1} parent=5 // pred_check
        _
      $region22: #{tpu_custom_call.1} parent=5 // pred_check_branch
        %107 = sbr.rel (%p104) target = $region24
      $region23: #{tpu_custom_call.1} parent=5 // pred_region
        %s108 = ssub.s32 %s10, 1
        %s109 = sand.u32 %s23, 1
        %s110 = scalar_lea.sflag [#allocation3], %s109
        %s111 = sand.u32 %s23, 1
        %s112 = smul.addr %s111, 512
        %s113 = scalar_lea.vmem [#allocation2], %s112
        // Predicated region
        $region25: #{tpu_custom_call.1} parent=23 // pred_check
          %p114 = pneg %p36
        $region26: #{tpu_custom_call.1} parent=23 // pred_check_branch
          %116 = sbr.rel (%p114) target = $region28
        $region27: #{tpu_custom_call.1} parent=23 // pred_region
          %117 = dma.done %s110, 8192
        $region28: #{tpu_custom_call.1} parent=23 // pred_fallthru
          _
        %s118 = sand.u32 %s23, 1
        %s119 = scalar_lea.sflag [#allocation3], %s118
        %s120 = sand.u32 %s23, 1
        %s121 = smul.addr %s120, 512
        %s122 = scalar_lea.vmem [#allocation2], %s121
        %p123 = pneg %p36
        %p124 = pneg %p33
        %p125 = pneg %p62
        %p126 = pneg %p59
        %s127 = smul.u32 64, %s15
        %p128 = scmp.lt.s32.totalorder %s127, 127
        %s129 = scalar_select %p128, %s127, 127
        %s130 = smul.addr %s129, 8
        %s131 = scalar_lea.vmem %s1, %s130
        %s132 = smul.u32 64, %s15
        %s133 = smul.u32 64, %s15
        %p134 = scmp.lt.s32.totalorder %s133, 127
        %s135 = scalar_select %p134, %s133, 127
        %s136 = smul.addr %s135, 8
        %s137 = scalar_lea.vmem %s1, %s136
        %s138 = smul.u32 64, %s15
        %v139 = vld [vmem:[%s113] sm:$0xff]
        %v140 = vld [vmem:[%s113 + $0x8] sm:$0xff]
        %v141 = vld [vmem:[%s113 + $0x10] sm:$0xff]
        %v142 = vld [vmem:[%s113 + $0x18] sm:$0xff]
        %v143 = vld [vmem:[%s113 + $0x20] sm:$0xff]
        %v144 = vld [vmem:[%s113 + $0x28] sm:$0xff]
        %v145 = vld [vmem:[%s113 + $0x30] sm:$0xff]
        %v146 = vld [vmem:[%s113 + $0x38] sm:$0xff]
        %v147 = vld [vmem:[%s113 + $0x40] sm:$0xff]
        %v148 = vld [vmem:[%s113 + $0x48] sm:$0xff]
        %v149 = vld [vmem:[%s113 + $0x50] sm:$0xff]
        %v150 = vld [vmem:[%s113 + $0x58] sm:$0xff]
        %v151 = vld [vmem:[%s113 + $0x60] sm:$0xff]
        %v152 = vld [vmem:[%s113 + $0x68] sm:$0xff]
        %v153 = vld [vmem:[%s113 + $0x70] sm:$0xff]
        %v154 = vld [vmem:[%s113 + $0x78] sm:$0xff]
        %v155 = vld [vmem:[%s113 + $0x80] sm:$0xff]
        %v156 = vld [vmem:[%s113 + $0x88] sm:$0xff]
        %v157 = vld [vmem:[%s113 + $0x90] sm:$0xff]
        %v158 = vld [vmem:[%s113 + $0x98] sm:$0xff]
        %v159 = vld [vmem:[%s113 + $0xa0] sm:$0xff]
        %v160 = vld [vmem:[%s113 + $0xa8] sm:$0xff]
        %v161 = vld [vmem:[%s113 + $0xb0] sm:$0xff]
        %v162 = vld [vmem:[%s113 + $0xb8] sm:$0xff]
        %v163 = vld [vmem:[%s113 + $0xc0] sm:$0xff]
        %v164 = vld [vmem:[%s113 + $0xc8] sm:$0xff]
        %v165 = vld [vmem:[%s113 + $0xd0] sm:$0xff]
        %v166 = vld [vmem:[%s113 + $0xd8] sm:$0xff]
        %v167 = vld [vmem:[%s113 + $0xe0] sm:$0xff]
        %v168 = vld [vmem:[%s113 + $0xe8] sm:$0xff]
        %v169 = vld [vmem:[%s113 + $0xf0] sm:$0xff]
        %v170 = vld [vmem:[%s113 + $0xf8] sm:$0xff]
        %v171 = vld [vmem:[%s113 + $0x100] sm:$0xff]
        %v172 = vld [vmem:[%s113 + $0x108] sm:$0xff]
        %v173 = vld [vmem:[%s113 + $0x110] sm:$0xff]
        %v174 = vld [vmem:[%s113 + $0x118] sm:$0xff]
        %v175 = vld [vmem:[%s113 + $0x120] sm:$0xff]
        %v176 = vld [vmem:[%s113 + $0x128] sm:$0xff]
        %v177 = vld [vmem:[%s113 + $0x130] sm:$0xff]
        %v178 = vld [vmem:[%s113 + $0x138] sm:$0xff]
        %v179 = vld [vmem:[%s113 + $0x140] sm:$0xff]
        %v180 = vld [vmem:[%s113 + $0x148] sm:$0xff]
        %v181 = vld [vmem:[%s113 + $0x150] sm:$0xff]
        %v182 = vld [vmem:[%s113 + $0x158] sm:$0xff]
        %v183 = vld [vmem:[%s113 + $0x160] sm:$0xff]
        %v184 = vld [vmem:[%s113 + $0x168] sm:$0xff]
        %v185 = vld [vmem:[%s113 + $0x170] sm:$0xff]
        %v186 = vld [vmem:[%s113 + $0x178] sm:$0xff]
        %v187 = vld [vmem:[%s113 + $0x180] sm:$0xff]
        %v188 = vld [vmem:[%s113 + $0x188] sm:$0xff]
        %v189 = vld [vmem:[%s113 + $0x190] sm:$0xff]
        %v190 = vld [vmem:[%s113 + $0x198] sm:$0xff]
        %v191 = vld [vmem:[%s113 + $0x1a0] sm:$0xff]
        %v192 = vld [vmem:[%s113 + $0x1a8] sm:$0xff]
        %v193 = vld [vmem:[%s113 + $0x1b0] sm:$0xff]
        %v194 = vld [vmem:[%s113 + $0x1b8] sm:$0xff]
        %v195 = vld [vmem:[%s113 + $0x1c0] sm:$0xff]
        %v196 = vld [vmem:[%s113 + $0x1c8] sm:$0xff]
        %v197 = vld [vmem:[%s113 + $0x1d0] sm:$0xff]
        %v198 = vld [vmem:[%s113 + $0x1d8] sm:$0xff]
        %v199 = vld [vmem:[%s113 + $0x1e0] sm:$0xff]
        %v200 = vld [vmem:[%s113 + $0x1e8] sm:$0xff]
        %v201 = vld [vmem:[%s113 + $0x1f0] sm:$0xff]
        %v202 = vld [vmem:[%s113 + $0x1f8] sm:$0xff]
        %vm203 = vcmp.ne.f32.partialorder %v139, %v139
        %vm204 = vcmp.ne.f32.partialorder %v140, %v140
        %vm205 = vcmp.ne.f32.partialorder %v141, %v141
        %vm206 = vcmp.ne.f32.partialorder %v142, %v142
        %vm207 = vcmp.ne.f32.partialorder %v143, %v143
        %vm208 = vcmp.ne.f32.partialorder %v144, %v144
        %vm209 = vcmp.ne.f32.partialorder %v145, %v145
        %vm210 = vcmp.ne.f32.partialorder %v146, %v146
        %vm211 = vcmp.ne.f32.partialorder %v147, %v147
        %vm212 = vcmp.ne.f32.partialorder %v148, %v148
        %vm213 = vcmp.ne.f32.partialorder %v149, %v149
        %vm214 = vcmp.ne.f32.partialorder %v150, %v150
        %vm215 = vcmp.ne.f32.partialorder %v151, %v151
        %vm216 = vcmp.ne.f32.partialorder %v152, %v152
        %vm217 = vcmp.ne.f32.partialorder %v153, %v153
        %vm218 = vcmp.ne.f32.partialorder %v154, %v154
        %vm219 = vcmp.ne.f32.partialorder %v155, %v155
        %vm220 = vcmp.ne.f32.partialorder %v156, %v156
        %vm221 = vcmp.ne.f32.partialorder %v157, %v157
        %vm222 = vcmp.ne.f32.partialorder %v158, %v158
        %vm223 = vcmp.ne.f32.partialorder %v159, %v159
        %vm224 = vcmp.ne.f32.partialorder %v160, %v160
        %vm225 = vcmp.ne.f32.partialorder %v161, %v161
        %vm226 = vcmp.ne.f32.partialorder %v162, %v162
        %vm227 = vcmp.ne.f32.partialorder %v163, %v163
        %vm228 = vcmp.ne.f32.partialorder %v164, %v164
        %vm229 = vcmp.ne.f32.partialorder %v165, %v165
        %vm230 = vcmp.ne.f32.partialorder %v166, %v166
        %vm231 = vcmp.ne.f32.partialorder %v167, %v167
        %vm232 = vcmp.ne.f32.partialorder %v168, %v168
        %vm233 = vcmp.ne.f32.partialorder %v169, %v169
        %vm234 = vcmp.ne.f32.partialorder %v170, %v170
        %vm235 = vcmp.ne.f32.partialorder %v171, %v171
        %vm236 = vcmp.ne.f32.partialorder %v172, %v172
        %vm237 = vcmp.ne.f32.partialorder %v173, %v173
        %vm238 = vcmp.ne.f32.partialorder %v174, %v174
        %vm239 = vcmp.ne.f32.partialorder %v175, %v175
        %vm240 = vcmp.ne.f32.partialorder %v176, %v176
        %vm241 = vcmp.ne.f32.partialorder %v177, %v177
        %vm242 = vcmp.ne.f32.partialorder %v178, %v178
        %vm243 = vcmp.ne.f32.partialorder %v179, %v179
        %vm244 = vcmp.ne.f32.partialorder %v180, %v180
        %vm245 = vcmp.ne.f32.partialorder %v181, %v181
        %vm246 = vcmp.ne.f32.partialorder %v182, %v182
        %vm247 = vcmp.ne.f32.partialorder %v183, %v183
        %vm248 = vcmp.ne.f32.partialorder %v184, %v184
        %vm249 = vcmp.ne.f32.partialorder %v185, %v185
        %vm250 = vcmp.ne.f32.partialorder %v186, %v186
        %vm251 = vcmp.ne.f32.partialorder %v187, %v187
        %vm252 = vcmp.ne.f32.partialorder %v188, %v188
        %vm253 = vcmp.ne.f32.partialorder %v189, %v189
        %vm254 = vcmp.ne.f32.partialorder %v190, %v190
        %vm255 = vcmp.ne.f32.partialorder %v191, %v191
        %vm256 = vcmp.ne.f32.partialorder %v192, %v192
        %vm257 = vcmp.ne.f32.partialorder %v193, %v193
        %vm258 = vcmp.ne.f32.partialorder %v194, %v194
        %vm259 = vcmp.ne.f32.partialorder %v195, %v195
        %vm260 = vcmp.ne.f32.partialorder %v196, %v196
        %vm261 = vcmp.ne.f32.partialorder %v197, %v197
        %vm262 = vcmp.ne.f32.partialorder %v198, %v198
        %vm263 = vcmp.ne.f32.partialorder %v199, %v199
        %vm264 = vcmp.ne.f32.partialorder %v200, %v200
        %vm265 = vcmp.ne.f32.partialorder %v201, %v201
        %vm266 = vcmp.ne.f32.partialorder %v202, %v202
        %v267 = vsel %vm203, inf, %v139
        %v268 = vsel %vm204, inf, %v140
        %v269 = vsel %vm205, inf, %v141
        %v270 = vsel %vm206, inf, %v142
        %v271 = vsel %vm207, inf, %v143
        %v272 = vsel %vm208, inf, %v144
        %v273 = vsel %vm209, inf, %v145
        %v274 = vsel %vm210, inf, %v146
        %v275 = vsel %vm211, inf, %v147
        %v276 = vsel %vm212, inf, %v148
        %v277 = vsel %vm213, inf, %v149
        %v278 = vsel %vm214, inf, %v150
        %v279 = vsel %vm215, inf, %v151
        %v280 = vsel %vm216, inf, %v152
        %v281 = vsel %vm217, inf, %v153
        %v282 = vsel %vm218, inf, %v154
        %v283 = vsel %vm219, inf, %v155
        %v284 = vsel %vm220, inf, %v156
        %v285 = vsel %vm221, inf, %v157
        %v286 = vsel %vm222, inf, %v158
        %v287 = vsel %vm223, inf, %v159
        %v288 = vsel %vm224, inf, %v160
        %v289 = vsel %vm225, inf, %v161
        %v290 = vsel %vm226, inf, %v162
        %v291 = vsel %vm227, inf, %v163
        %v292 = vsel %vm228, inf, %v164
        %v293 = vsel %vm229, inf, %v165
        %v294 = vsel %vm230, inf, %v166
        %v295 = vsel %vm231, inf, %v167
        %v296 = vsel %vm232, inf, %v168
        %v297 = vsel %vm233, inf, %v169
        %v298 = vsel %vm234, inf, %v170
        %v299 = vsel %vm235, inf, %v171
        %v300 = vsel %vm236, inf, %v172
        %v301 = vsel %vm237, inf, %v173
        %v302 = vsel %vm238, inf, %v174
        %v303 = vsel %vm239, inf, %v175
        %v304 = vsel %vm240, inf, %v176
        %v305 = vsel %vm241, inf, %v177
        %v306 = vsel %vm242, inf, %v178
        %v307 = vsel %vm243, inf, %v179
        %v308 = vsel %vm244, inf, %v180
        %v309 = vsel %vm245, inf, %v181
        %v310 = vsel %vm246, inf, %v182
        %v311 = vsel %vm247, inf, %v183
        %v312 = vsel %vm248, inf, %v184
        %v313 = vsel %vm249, inf, %v185
        %v314 = vsel %vm250, inf, %v186
        %v315 = vsel %vm251, inf, %v187
        %v316 = vsel %vm252, inf, %v188
        %v317 = vsel %vm253, inf, %v189
        %v318 = vsel %vm254, inf, %v190
        %v319 = vsel %vm255, inf, %v191
        %v320 = vsel %vm256, inf, %v192
        %v321 = vsel %vm257, inf, %v193
        %v322 = vsel %vm258, inf, %v194
        %v323 = vsel %vm259, inf, %v195
        %v324 = vsel %vm260, inf, %v196
        %v325 = vsel %vm261, inf, %v197
        %v326 = vsel %vm262, inf, %v198
        %v327 = vsel %vm263, inf, %v199
        %v328 = vsel %vm264, inf, %v200
        %v329 = vsel %vm265, inf, %v201
        %v330 = vsel %vm266, inf, %v202
        %v331 = vlaneseq
        %v332 = vand.u32 %v331, 127
        %v333 = vand.u32 %v332, 7
        %v334 = vcvt.s32.f32 %v333
        %v335 = vadd.s32 %v332, 1
        %v336 = vand.u32 %v335, 7
        %v337 = vcvt.s32.f32 %v336
        %338 = vrot.lane.b32.xlu0 %v267, 127
        %v339 = vpop.permute.xlu0 %338
        %340 = vrot.lane.b32.xlu0 %v268, 127
        %v341 = vpop.permute.xlu0 %340
        %342 = vrot.lane.b32.xlu0 %v269, 127
        %v343 = vpop.permute.xlu0 %342
        %344 = vrot.lane.b32.xlu0 %v270, 127
        %v345 = vpop.permute.xlu0 %344
        %346 = vrot.lane.b32.xlu0 %v271, 127
        %v347 = vpop.permute.xlu0 %346
        %348 = vrot.lane.b32.xlu0 %v272, 127
        %v349 = vpop.permute.xlu0 %348
        %350 = vrot.lane.b32.xlu0 %v273, 127
        %v351 = vpop.permute.xlu0 %350
        %352 = vrot.lane.b32.xlu0 %v274, 127
        %v353 = vpop.permute.xlu0 %352
        %354 = vrot.lane.b32.xlu0 %v275, 127
        %v355 = vpop.permute.xlu0 %354
        %356 = vrot.lane.b32.xlu0 %v276, 127
        %v357 = vpop.permute.xlu0 %356
        %358 = vrot.lane.b32.xlu0 %v277, 127
        %v359 = vpop.permute.xlu0 %358
        %360 = vrot.lane.b32.xlu0 %v278, 127
        %v361 = vpop.permute.xlu0 %360
        %362 = vrot.lane.b32.xlu0 %v279, 127
        %v363 = vpop.permute.xlu0 %362
        %364 = vrot.lane.b32.xlu0 %v280, 127
        %v365 = vpop.permute.xlu0 %364
        %366 = vrot.lane.b32.xlu0 %v281, 127
        %v367 = vpop.permute.xlu0 %366
        %368 = vrot.lane.b32.xlu0 %v282, 127
        %v369 = vpop.permute.xlu0 %368
        %370 = vrot.lane.b32.xlu0 %v283, 127
        %v371 = vpop.permute.xlu0 %370
        %372 = vrot.lane.b32.xlu0 %v284, 127
        %v373 = vpop.permute.xlu0 %372
        %374 = vrot.lane.b32.xlu0 %v285, 127
        %v375 = vpop.permute.xlu0 %374
        %376 = vrot.lane.b32.xlu0 %v286, 127
        %v377 = vpop.permute.xlu0 %376
        %378 = vrot.lane.b32.xlu0 %v287, 127
        %v379 = vpop.permute.xlu0 %378
        %380 = vrot.lane.b32.xlu0 %v288, 127
        %v381 = vpop.permute.xlu0 %380
        %382 = vrot.lane.b32.xlu0 %v289, 127
        %v383 = vpop.permute.xlu0 %382
        %384 = vrot.lane.b32.xlu0 %v290, 127
        %v385 = vpop.permute.xlu0 %384
        %386 = vrot.lane.b32.xlu0 %v291, 127
        %v387 = vpop.permute.xlu0 %386
        %388 = vrot.lane.b32.xlu0 %v292, 127
        %v389 = vpop.permute.xlu0 %388
        %390 = vrot.lane.b32.xlu0 %v293, 127
        %v391 = vpop.permute.xlu0 %390
        %392 = vrot.lane.b32.xlu0 %v294, 127
        %v393 = vpop.permute.xlu0 %392
        %394 = vrot.lane.b32.xlu0 %v295, 127
        %v395 = vpop.permute.xlu0 %394
        %396 = vrot.lane.b32.xlu0 %v296, 127
        %v397 = vpop.permute.xlu0 %396
        %398 = vrot.lane.b32.xlu0 %v297, 127
        %v399 = vpop.permute.xlu0 %398
        %400 = vrot.lane.b32.xlu0 %v298, 127
        %v401 = vpop.permute.xlu0 %400
        %402 = vrot.lane.b32.xlu0 %v299, 127
        %v403 = vpop.permute.xlu0 %402
        %404 = vrot.lane.b32.xlu0 %v300, 127
        %v405 = vpop.permute.xlu0 %404
        %406 = vrot.lane.b32.xlu0 %v301, 127
        %v407 = vpop.permute.xlu0 %406
        %408 = vrot.lane.b32.xlu0 %v302, 127
        %v409 = vpop.permute.xlu0 %408
        %410 = vrot.lane.b32.xlu0 %v303, 127
        %v411 = vpop.permute.xlu0 %410
        %412 = vrot.lane.b32.xlu0 %v304, 127
        %v413 = vpop.permute.xlu0 %412
        %414 = vrot.lane.b32.xlu0 %v305, 127
        %v415 = vpop.permute.xlu0 %414
        %416 = vrot.lane.b32.xlu0 %v306, 127
        %v417 = vpop.permute.xlu0 %416
        %418 = vrot.lane.b32.xlu0 %v307, 127
        %v419 = vpop.permute.xlu0 %418
        %420 = vrot.lane.b32.xlu0 %v308, 127
        %v421 = vpop.permute.xlu0 %420
        %422 = vrot.lane.b32.xlu0 %v309, 127
        %v423 = vpop.permute.xlu0 %422
        %424 = vrot.lane.b32.xlu0 %v310, 127
        %v425 = vpop.permute.xlu0 %424
        %426 = vrot.lane.b32.xlu0 %v311, 127
        %v427 = vpop.permute.xlu0 %426
        %428 = vrot.lane.b32.xlu0 %v312, 127
        %v429 = vpop.permute.xlu0 %428
        %430 = vrot.lane.b32.xlu0 %v313, 127
        %v431 = vpop.permute.xlu0 %430
        %432 = vrot.lane.b32.xlu0 %v314, 127
        %v433 = vpop.permute.xlu0 %432
        %434 = vrot.lane.b32.xlu0 %v315, 127
        %v435 = vpop.permute.xlu0 %434
        %436 = vrot.lane.b32.xlu0 %v316, 127
        %v437 = vpop.permute.xlu0 %436
        %438 = vrot.lane.b32.xlu0 %v317, 127
        %v439 = vpop.permute.xlu0 %438
        %440 = vrot.lane.b32.xlu0 %v318, 127
        %v441 = vpop.permute.xlu0 %440
        %442 = vrot.lane.b32.xlu0 %v319, 127
        %v443 = vpop.permute.xlu0 %442
        %444 = vrot.lane.b32.xlu0 %v320, 127
        %v445 = vpop.permute.xlu0 %444
        %446 = vrot.lane.b32.xlu0 %v321, 127
        %v447 = vpop.permute.xlu0 %446
        %448 = vrot.lane.b32.xlu0 %v322, 127
        %v449 = vpop.permute.xlu0 %448
        %450 = vrot.lane.b32.xlu0 %v323, 127
        %v451 = vpop.permute.xlu0 %450
        %452 = vrot.lane.b32.xlu0 %v324, 127
        %v453 = vpop.permute.xlu0 %452
        %454 = vrot.lane.b32.xlu0 %v325, 127
        %v455 = vpop.permute.xlu0 %454
        %456 = vrot.lane.b32.xlu0 %v326, 127
        %v457 = vpop.permute.xlu0 %456
        %458 = vrot.lane.b32.xlu0 %v327, 127
        %v459 = vpop.permute.xlu0 %458
        %460 = vrot.lane.b32.xlu0 %v328, 127
        %v461 = vpop.permute.xlu0 %460
        %462 = vrot.lane.b32.xlu0 %v329, 127
        %v463 = vpop.permute.xlu0 %462
        %464 = vrot.lane.b32.xlu0 %v330, 127
        %v465 = vpop.permute.xlu0 %464
        %vm466 = vcmp.gt.f32.partialorder %v339, %v267
        %vm467 = vcmp.gt.f32.partialorder %v341, %v268
        %vm468 = vcmp.gt.f32.partialorder %v343, %v269
        %vm469 = vcmp.gt.f32.partialorder %v345, %v270
        %vm470 = vcmp.gt.f32.partialorder %v347, %v271
        %vm471 = vcmp.gt.f32.partialorder %v349, %v272
        %vm472 = vcmp.gt.f32.partialorder %v351, %v273
        %vm473 = vcmp.gt.f32.partialorder %v353, %v274
        %vm474 = vcmp.gt.f32.partialorder %v355, %v275
        %vm475 = vcmp.gt.f32.partialorder %v357, %v276
        %vm476 = vcmp.gt.f32.partialorder %v359, %v277
        %vm477 = vcmp.gt.f32.partialorder %v361, %v278
        %vm478 = vcmp.gt.f32.partialorder %v363, %v279
        %vm479 = vcmp.gt.f32.partialorder %v365, %v280
        %vm480 = vcmp.gt.f32.partialorder %v367, %v281
        %vm481 = vcmp.gt.f32.partialorder %v369, %v282
        %vm482 = vcmp.gt.f32.partialorder %v371, %v283
        %vm483 = vcmp.gt.f32.partialorder %v373, %v284
        %vm484 = vcmp.gt.f32.partialorder %v375, %v285
        %vm485 = vcmp.gt.f32.partialorder %v377, %v286
        %vm486 = vcmp.gt.f32.partialorder %v379, %v287
        %vm487 = vcmp.gt.f32.partialorder %v381, %v288
        %vm488 = vcmp.gt.f32.partialorder %v383, %v289
        %vm489 = vcmp.gt.f32.partialorder %v385, %v290
        %vm490 = vcmp.gt.f32.partialorder %v387, %v291
        %vm491 = vcmp.gt.f32.partialorder %v389, %v292
        %vm492 = vcmp.gt.f32.partialorder %v391, %v293
        %vm493 = vcmp.gt.f32.partialorder %v393, %v294
        %vm494 = vcmp.gt.f32.partialorder %v395, %v295
        %vm495 = vcmp.gt.f32.partialorder %v397, %v296
        %vm496 = vcmp.gt.f32.partialorder %v399, %v297
        %vm497 = vcmp.gt.f32.partialorder %v401, %v298
        %vm498 = vcmp.gt.f32.partialorder %v403, %v299
        %vm499 = vcmp.gt.f32.partialorder %v405, %v300
        %vm500 = vcmp.gt.f32.partialorder %v407, %v301
        %vm501 = vcmp.gt.f32.partialorder %v409, %v302
        %vm502 = vcmp.gt.f32.partialorder %v411, %v303
        %vm503 = vcmp.gt.f32.partialorder %v413, %v304
        %vm504 = vcmp.gt.f32.partialorder %v415, %v305
        %vm505 = vcmp.gt.f32.partialorder %v417, %v306
        %vm506 = vcmp.gt.f32.partialorder %v419, %v307
        %vm507 = vcmp.gt.f32.partialorder %v421, %v308
        %vm508 = vcmp.gt.f32.partialorder %v423, %v309
        %vm509 = vcmp.gt.f32.partialorder %v425, %v310
        %vm510 = vcmp.gt.f32.partialorder %v427, %v311
        %vm511 = vcmp.gt.f32.partialorder %v429, %v312
        %vm512 = vcmp.gt.f32.partialorder %v431, %v313
        %vm513 = vcmp.gt.f32.partialorder %v433, %v314
        %vm514 = vcmp.gt.f32.partialorder %v435, %v315
        %vm515 = vcmp.gt.f32.partialorder %v437, %v316
        %vm516 = vcmp.gt.f32.partialorder %v439, %v317
        %vm517 = vcmp.gt.f32.partialorder %v441, %v318
        %vm518 = vcmp.gt.f32.partialorder %v443, %v319
        %vm519 = vcmp.gt.f32.partialorder %v445, %v320
        %vm520 = vcmp.gt.f32.partialorder %v447, %v321
        %vm521 = vcmp.gt.f32.partialorder %v449, %v322
        %vm522 = vcmp.gt.f32.partialorder %v451, %v323
        %vm523 = vcmp.gt.f32.partialorder %v453, %v324
        %vm524 = vcmp.gt.f32.partialorder %v455, %v325
        %vm525 = vcmp.gt.f32.partialorder %v457, %v326
        %vm526 = vcmp.gt.f32.partialorder %v459, %v327
        %vm527 = vcmp.gt.f32.partialorder %v461, %v328
        %vm528 = vcmp.gt.f32.partialorder %v463, %v329
        %vm529 = vcmp.gt.f32.partialorder %v465, %v330
        %v530 = vsel %vm466, %v337, %v334
        %v531 = vsel %vm467, %v337, %v334
        %v532 = vsel %vm468, %v337, %v334
        %v533 = vsel %vm469, %v337, %v334
        %v534 = vsel %vm470, %v337, %v334
        %v535 = vsel %vm471, %v337, %v334
        %v536 = vsel %vm472, %v337, %v334
        %v537 = vsel %vm473, %v337, %v334
        %v538 = vsel %vm474, %v337, %v334
        %v539 = vsel %vm475, %v337, %v334
        %v540 = vsel %vm476, %v337, %v334
        %v541 = vsel %vm477, %v337, %v334
        %v542 = vsel %vm478, %v337, %v334
        %v543 = vsel %vm479, %v337, %v334
        %v544 = vsel %vm480, %v337, %v334
        %v545 = vsel %vm481, %v337, %v334
        %v546 = vsel %vm482, %v337, %v334
        %v547 = vsel %vm483, %v337, %v334
        %v548 = vsel %vm484, %v337, %v334
        %v549 = vsel %vm485, %v337, %v334
        %v550 = vsel %vm486, %v337, %v334
        %v551 = vsel %vm487, %v337, %v334
        %v552 = vsel %vm488, %v337, %v334
        %v553 = vsel %vm489, %v337, %v334
        %v554 = vsel %vm490, %v337, %v334
        %v555 = vsel %vm491, %v337, %v334
        %v556 = vsel %vm492, %v337, %v334
        %v557 = vsel %vm493, %v337, %v334
        %v558 = vsel %vm494, %v337, %v334
        %v559 = vsel %vm495, %v337, %v334
        %v560 = vsel %vm496, %v337, %v334
        %v561 = vsel %vm497, %v337, %v334
        %v562 = vsel %vm498, %v337, %v334
        %v563 = vsel %vm499, %v337, %v334
        %v564 = vsel %vm500, %v337, %v334
        %v565 = vsel %vm501, %v337, %v334
        %v566 = vsel %vm502, %v337, %v334
        %v567 = vsel %vm503, %v337, %v334
        %v568 = vsel %vm504, %v337, %v334
        %v569 = vsel %vm505, %v337, %v334
        %v570 = vsel %vm506, %v337, %v334
        %v571 = vsel %vm507, %v337, %v334
        %v572 = vsel %vm508, %v337, %v334
        %v573 = vsel %vm509, %v337, %v334
        %v574 = vsel %vm510, %v337, %v334
        %v575 = vsel %vm511, %v337, %v334
        %v576 = vsel %vm512, %v337, %v334
        %v577 = vsel %vm513, %v337, %v334
        %v578 = vsel %vm514, %v337, %v334
        %v579 = vsel %vm515, %v337, %v334
        %v580 = vsel %vm516, %v337, %v334
        %v581 = vsel %vm517, %v337, %v334
        %v582 = vsel %vm518, %v337, %v334
        %v583 = vsel %vm519, %v337, %v334
        %v584 = vsel %vm520, %v337, %v334
        %v585 = vsel %vm521, %v337, %v334
        %v586 = vsel %vm522, %v337, %v334
        %v587 = vsel %vm523, %v337, %v334
        %v588 = vsel %vm524, %v337, %v334
        %v589 = vsel %vm525, %v337, %v334
        %v590 = vsel %vm526, %v337, %v334
        %v591 = vsel %vm527, %v337, %v334
        %v592 = vsel %vm528, %v337, %v334
        %v593 = vsel %vm529, %v337, %v334
        %v594 = vmax.f32 %v267, %v339
        %v595 = vmax.f32 %v268, %v341
        %v596 = vmax.f32 %v269, %v343
        %v597 = vmax.f32 %v270, %v345
        %v598 = vmax.f32 %v271, %v347
        %v599 = vmax.f32 %v272, %v349
        %v600 = vmax.f32 %v273, %v351
        %v601 = vmax.f32 %v274, %v353
        %v602 = vmax.f32 %v275, %v355
        %v603 = vmax.f32 %v276, %v357
        %v604 = vmax.f32 %v277, %v359
        %v605 = vmax.f32 %v278, %v361
        %v606 = vmax.f32 %v279, %v363
        %v607 = vmax.f32 %v280, %v365
        %v608 = vmax.f32 %v281, %v367
        %v609 = vmax.f32 %v282, %v369
        %v610 = vmax.f32 %v283, %v371
        %v611 = vmax.f32 %v284, %v373
        %v612 = vmax.f32 %v285, %v375
        %v613 = vmax.f32 %v286, %v377
        %v614 = vmax.f32 %v287, %v379
        %v615 = vmax.f32 %v288, %v381
        %v616 = vmax.f32 %v289, %v383
        %v617 = vmax.f32 %v290, %v385
        %v618 = vmax.f32 %v291, %v387
        %v619 = vmax.f32 %v292, %v389
        %v620 = vmax.f32 %v293, %v391
        %v621 = vmax.f32 %v294, %v393
        %v622 = vmax.f32 %v295, %v395
        %v623 = vmax.f32 %v296, %v397
        %v624 = vmax.f32 %v297, %v399
        %v625 = vmax.f32 %v298, %v401
        %v626 = vmax.f32 %v299, %v403
        %v627 = vmax.f32 %v300, %v405
        %v628 = vmax.f32 %v301, %v407
        %v629 = vmax.f32 %v302, %v409
        %v630 = vmax.f32 %v303, %v411
        %v631 = vmax.f32 %v304, %v413
        %v632 = vmax.f32 %v305, %v415
        %v633 = vmax.f32 %v306, %v417
        %v634 = vmax.f32 %v307, %v419
        %v635 = vmax.f32 %v308, %v421
        %v636 = vmax.f32 %v309, %v423
        %v637 = vmax.f32 %v310, %v425
        %v638 = vmax.f32 %v311, %v427
        %v639 = vmax.f32 %v312, %v429
        %v640 = vmax.f32 %v313, %v431
        %v641 = vmax.f32 %v314, %v433
        %v642 = vmax.f32 %v315, %v435
        %v643 = vmax.f32 %v316, %v437
        %v644 = vmax.f32 %v317, %v439
        %v645 = vmax.f32 %v318, %v441
        %v646 = vmax.f32 %v319, %v443
        %v647 = vmax.f32 %v320, %v445
        %v648 = vmax.f32 %v321, %v447
        %v649 = vmax.f32 %v322, %v449
        %v650 = vmax.f32 %v323, %v451
        %v651 = vmax.f32 %v324, %v453
        %v652 = vmax.f32 %v325, %v455
        %v653 = vmax.f32 %v326, %v457
        %v654 = vmax.f32 %v327, %v459
        %v655 = vmax.f32 %v328, %v461
        %v656 = vmax.f32 %v329, %v463
        %v657 = vmax.f32 %v330, %v465
        %658 = vrot.lane.b32.xlu0 %v594, 126
        %v659 = vpop.permute.xlu0 %658
        %660 = vrot.lane.b32.xlu0 %v595, 126
        %v661 = vpop.permute.xlu0 %660
        %662 = vrot.lane.b32.xlu0 %v596, 126
        %v663 = vpop.permute.xlu0 %662
        %664 = vrot.lane.b32.xlu0 %v597, 126
        %v665 = vpop.permute.xlu0 %664
        %666 = vrot.lane.b32.xlu0 %v598, 126
        %v667 = vpop.permute.xlu0 %666
        %668 = vrot.lane.b32.xlu0 %v599, 126
        %v669 = vpop.permute.xlu0 %668
        %670 = vrot.lane.b32.xlu0 %v600, 126
        %v671 = vpop.permute.xlu0 %670
        %672 = vrot.lane.b32.xlu0 %v601, 126
        %v673 = vpop.permute.xlu0 %672
        %674 = vrot.lane.b32.xlu0 %v602, 126
        %v675 = vpop.permute.xlu0 %674
        %676 = vrot.lane.b32.xlu0 %v603, 126
        %v677 = vpop.permute.xlu0 %676
        %678 = vrot.lane.b32.xlu0 %v604, 126
        %v679 = vpop.permute.xlu0 %678
        %680 = vrot.lane.b32.xlu0 %v605, 126
        %v681 = vpop.permute.xlu0 %680
        %682 = vrot.lane.b32.xlu0 %v606, 126
        %v683 = vpop.permute.xlu0 %682
        %684 = vrot.lane.b32.xlu0 %v607, 126
        %v685 = vpop.permute.xlu0 %684
        %686 = vrot.lane.b32.xlu0 %v608, 126
        %v687 = vpop.permute.xlu0 %686
        %688 = vrot.lane.b32.xlu0 %v609, 126
        %v689 = vpop.permute.xlu0 %688
        %690 = vrot.lane.b32.xlu0 %v610, 126
        %v691 = vpop.permute.xlu0 %690
        %692 = vrot.lane.b32.xlu0 %v611, 126
        %v693 = vpop.permute.xlu0 %692
        %694 = vrot.lane.b32.xlu0 %v612, 126
        %v695 = vpop.permute.xlu0 %694
        %696 = vrot.lane.b32.xlu0 %v613, 126
        %v697 = vpop.permute.xlu0 %696
        %698 = vrot.lane.b32.xlu0 %v614, 126
        %v699 = vpop.permute.xlu0 %698
        %700 = vrot.lane.b32.xlu0 %v615, 126
        %v701 = vpop.permute.xlu0 %700
        %702 = vrot.lane.b32.xlu0 %v616, 126
        %v703 = vpop.permute.xlu0 %702
        %704 = vrot.lane.b32.xlu0 %v617, 126
        %v705 = vpop.permute.xlu0 %704
        %706 = vrot.lane.b32.xlu0 %v618, 126
        %v707 = vpop.permute.xlu0 %706
        %708 = vrot.lane.b32.xlu0 %v619, 126
        %v709 = vpop.permute.xlu0 %708
        %710 = vrot.lane.b32.xlu0 %v620, 126
        %v711 = vpop.permute.xlu0 %710
        %712 = vrot.lane.b32.xlu0 %v621, 126
        %v713 = vpop.permute.xlu0 %712
        %714 = vrot.lane.b32.xlu0 %v622, 126
        %v715 = vpop.permute.xlu0 %714
        %716 = vrot.lane.b32.xlu0 %v623, 126
        %v717 = vpop.permute.xlu0 %716
        %718 = vrot.lane.b32.xlu0 %v624, 126
        %v719 = vpop.permute.xlu0 %718
        %720 = vrot.lane.b32.xlu0 %v625, 126
        %v721 = vpop.permute.xlu0 %720
        %722 = vrot.lane.b32.xlu0 %v626, 126
        %v723 = vpop.permute.xlu0 %722
        %724 = vrot.lane.b32.xlu0 %v627, 126
        %v725 = vpop.permute.xlu0 %724
        %726 = vrot.lane.b32.xlu0 %v628, 126
        %v727 = vpop.permute.xlu0 %726
        %728 = vrot.lane.b32.xlu0 %v629, 126
        %v729 = vpop.permute.xlu0 %728
        %730 = vrot.lane.b32.xlu0 %v630, 126
        %v731 = vpop.permute.xlu0 %730
        %732 = vrot.lane.b32.xlu0 %v631, 126
        %v733 = vpop.permute.xlu0 %732
        %734 = vrot.lane.b32.xlu0 %v632, 126
        %v735 = vpop.permute.xlu0 %734
        %736 = vrot.lane.b32.xlu0 %v633, 126
        %v737 = vpop.permute.xlu0 %736
        %738 = vrot.lane.b32.xlu0 %v634, 126
        %v739 = vpop.permute.xlu0 %738
        %740 = vrot.lane.b32.xlu0 %v635, 126
        %v741 = vpop.permute.xlu0 %740
        %742 = vrot.lane.b32.xlu0 %v636, 126
        %v743 = vpop.permute.xlu0 %742
        %744 = vrot.lane.b32.xlu0 %v637, 126
        %v745 = vpop.permute.xlu0 %744
        %746 = vrot.lane.b32.xlu0 %v638, 126
        %v747 = vpop.permute.xlu0 %746
        %748 = vrot.lane.b32.xlu0 %v639, 126
        %v749 = vpop.permute.xlu0 %748
        %750 = vrot.lane.b32.xlu0 %v640, 126
        %v751 = vpop.permute.xlu0 %750
        %752 = vrot.lane.b32.xlu0 %v641, 126
        %v753 = vpop.permute.xlu0 %752
        %754 = vrot.lane.b32.xlu0 %v642, 126
        %v755 = vpop.permute.xlu0 %754
        %756 = vrot.lane.b32.xlu0 %v643, 126
        %v757 = vpop.permute.xlu0 %756
        %758 = vrot.lane.b32.xlu0 %v644, 126
        %v759 = vpop.permute.xlu0 %758
        %760 = vrot.lane.b32.xlu0 %v645, 126
        %v761 = vpop.permute.xlu0 %760
        %762 = vrot.lane.b32.xlu0 %v646, 126
        %v763 = vpop.permute.xlu0 %762
        %764 = vrot.lane.b32.xlu0 %v647, 126
        %v765 = vpop.permute.xlu0 %764
        %766 = vrot.lane.b32.xlu0 %v648, 126
        %v767 = vpop.permute.xlu0 %766
        %768 = vrot.lane.b32.xlu0 %v649, 126
        %v769 = vpop.permute.xlu0 %768
        %770 = vrot.lane.b32.xlu0 %v650, 126
        %v771 = vpop.permute.xlu0 %770
        %772 = vrot.lane.b32.xlu0 %v651, 126
        %v773 = vpop.permute.xlu0 %772
        %774 = vrot.lane.b32.xlu0 %v652, 126
        %v775 = vpop.permute.xlu0 %774
        %776 = vrot.lane.b32.xlu0 %v653, 126
        %v777 = vpop.permute.xlu0 %776
        %778 = vrot.lane.b32.xlu0 %v654, 126
        %v779 = vpop.permute.xlu0 %778
        %780 = vrot.lane.b32.xlu0 %v655, 126
        %v781 = vpop.permute.xlu0 %780
        %782 = vrot.lane.b32.xlu0 %v656, 126
        %v783 = vpop.permute.xlu0 %782
        %784 = vrot.lane.b32.xlu0 %v657, 126
        %v785 = vpop.permute.xlu0 %784
        %786 = vrot.lane.b32.xlu0 %v530, 126
        %v787 = vpop.permute.xlu0 %786
        %788 = vrot.lane.b32.xlu0 %v531, 126
        %v789 = vpop.permute.xlu0 %788
        %790 = vrot.lane.b32.xlu0 %v532, 126
        %v791 = vpop.permute.xlu0 %790
        %792 = vrot.lane.b32.xlu0 %v533, 126
        %v793 = vpop.permute.xlu0 %792
        %794 = vrot.lane.b32.xlu0 %v534, 126
        %v795 = vpop.permute.xlu0 %794
        %796 = vrot.lane.b32.xlu0 %v535, 126
        %v797 = vpop.permute.xlu0 %796
        %798 = vrot.lane.b32.xlu0 %v536, 126
        %v799 = vpop.permute.xlu0 %798
        %800 = vrot.lane.b32.xlu0 %v537, 126
        %v801 = vpop.permute.xlu0 %800
        %802 = vrot.lane.b32.xlu0 %v538, 126
        %v803 = vpop.permute.xlu0 %802
        %804 = vrot.lane.b32.xlu0 %v539, 126
        %v805 = vpop.permute.xlu0 %804
        %806 = vrot.lane.b32.xlu0 %v540, 126
        %v807 = vpop.permute.xlu0 %806
        %808 = vrot.lane.b32.xlu0 %v541, 126
        %v809 = vpop.permute.xlu0 %808
        %810 = vrot.lane.b32.xlu0 %v542, 126
        %v811 = vpop.permute.xlu0 %810
        %812 = vrot.lane.b32.xlu0 %v543, 126
        %v813 = vpop.permute.xlu0 %812
        %814 = vrot.lane.b32.xlu0 %v544, 126
        %v815 = vpop.permute.xlu0 %814
        %816 = vrot.lane.b32.xlu0 %v545, 126
        %v817 = vpop.permute.xlu0 %816
        %818 = vrot.lane.b32.xlu0 %v546, 126
        %v819 = vpop.permute.xlu0 %818
        %820 = vrot.lane.b32.xlu0 %v547, 126
        %v821 = vpop.permute.xlu0 %820
        %822 = vrot.lane.b32.xlu0 %v548, 126
        %v823 = vpop.permute.xlu0 %822
        %824 = vrot.lane.b32.xlu0 %v549, 126
        %v825 = vpop.permute.xlu0 %824
        %826 = vrot.lane.b32.xlu0 %v550, 126
        %v827 = vpop.permute.xlu0 %826
        %828 = vrot.lane.b32.xlu0 %v551, 126
        %v829 = vpop.permute.xlu0 %828
        %830 = vrot.lane.b32.xlu0 %v552, 126
        %v831 = vpop.permute.xlu0 %830
        %832 = vrot.lane.b32.xlu0 %v553, 126
        %v833 = vpop.permute.xlu0 %832
        %834 = vrot.lane.b32.xlu0 %v554, 126
        %v835 = vpop.permute.xlu0 %834
        %836 = vrot.lane.b32.xlu0 %v555, 126
        %v837 = vpop.permute.xlu0 %836
        %838 = vrot.lane.b32.xlu0 %v556, 126
        %v839 = vpop.permute.xlu0 %838
        %840 = vrot.lane.b32.xlu0 %v557, 126
        %v841 = vpop.permute.xlu0 %840
        %842 = vrot.lane.b32.xlu0 %v558, 126
        %v843 = vpop.permute.xlu0 %842
        %844 = vrot.lane.b32.xlu0 %v559, 126
        %v845 = vpop.permute.xlu0 %844
        %846 = vrot.lane.b32.xlu0 %v560, 126
        %v847 = vpop.permute.xlu0 %846
        %848 = vrot.lane.b32.xlu0 %v561, 126
        %v849 = vpop.permute.xlu0 %848
        %850 = vrot.lane.b32.xlu0 %v562, 126
        %v851 = vpop.permute.xlu0 %850
        %852 = vrot.lane.b32.xlu0 %v563, 126
        %v853 = vpop.permute.xlu0 %852
        %854 = vrot.lane.b32.xlu0 %v564, 126
        %v855 = vpop.permute.xlu0 %854
        %856 = vrot.lane.b32.xlu0 %v565, 126
        %v857 = vpop.permute.xlu0 %856
        %858 = vrot.lane.b32.xlu0 %v566, 126
        %v859 = vpop.permute.xlu0 %858
        %860 = vrot.lane.b32.xlu0 %v567, 126
        %v861 = vpop.permute.xlu0 %860
        %862 = vrot.lane.b32.xlu0 %v568, 126
        %v863 = vpop.permute.xlu0 %862
        %864 = vrot.lane.b32.xlu0 %v569, 126
        %v865 = vpop.permute.xlu0 %864
        %866 = vrot.lane.b32.xlu0 %v570, 126
        %v867 = vpop.permute.xlu0 %866
        %868 = vrot.lane.b32.xlu0 %v571, 126
        %v869 = vpop.permute.xlu0 %868
        %870 = vrot.lane.b32.xlu0 %v572, 126
        %v871 = vpop.permute.xlu0 %870
        %872 = vrot.lane.b32.xlu0 %v573, 126
        %v873 = vpop.permute.xlu0 %872
        %874 = vrot.lane.b32.xlu0 %v574, 126
        %v875 = vpop.permute.xlu0 %874
        %876 = vrot.lane.b32.xlu0 %v575, 126
        %v877 = vpop.permute.xlu0 %876
        %878 = vrot.lane.b32.xlu0 %v576, 126
        %v879 = vpop.permute.xlu0 %878
        %880 = vrot.lane.b32.xlu0 %v577, 126
        %v881 = vpop.permute.xlu0 %880
        %882 = vrot.lane.b32.xlu0 %v578, 126
        %v883 = vpop.permute.xlu0 %882
        %884 = vrot.lane.b32.xlu0 %v579, 126
        %v885 = vpop.permute.xlu0 %884
        %886 = vrot.lane.b32.xlu0 %v580, 126
        %v887 = vpop.permute.xlu0 %886
        %888 = vrot.lane.b32.xlu0 %v581, 126
        %v889 = vpop.permute.xlu0 %888
        %890 = vrot.lane.b32.xlu0 %v582, 126
        %v891 = vpop.permute.xlu0 %890
        %892 = vrot.lane.b32.xlu0 %v583, 126
        %v893 = vpop.permute.xlu0 %892
        %894 = vrot.lane.b32.xlu0 %v584, 126
        %v895 = vpop.permute.xlu0 %894
        %896 = vrot.lane.b32.xlu0 %v585, 126
        %v897 = vpop.permute.xlu0 %896
        %898 = vrot.lane.b32.xlu0 %v586, 126
        %v899 = vpop.permute.xlu0 %898
        %900 = vrot.lane.b32.xlu0 %v587, 126
        %v901 = vpop.permute.xlu0 %900
        %902 = vrot.lane.b32.xlu0 %v588, 126
        %v903 = vpop.permute.xlu0 %902
        %904 = vrot.lane.b32.xlu0 %v589, 126
        %v905 = vpop.permute.xlu0 %904
        %906 = vrot.lane.b32.xlu0 %v590, 126
        %v907 = vpop.permute.xlu0 %906
        %908 = vrot.lane.b32.xlu0 %v591, 126
        %v909 = vpop.permute.xlu0 %908
        %910 = vrot.lane.b32.xlu0 %v592, 126
        %v911 = vpop.permute.xlu0 %910
        %912 = vrot.lane.b32.xlu0 %v593, 126
        %v913 = vpop.permute.xlu0 %912
        %vm914 = vcmp.gt.f32.partialorder %v659, %v594
        %vm915 = vcmp.gt.f32.partialorder %v661, %v595
        %vm916 = vcmp.gt.f32.partialorder %v663, %v596
        %vm917 = vcmp.gt.f32.partialorder %v665, %v597
        %vm918 = vcmp.gt.f32.partialorder %v667, %v598
        %vm919 = vcmp.gt.f32.partialorder %v669, %v599
        %vm920 = vcmp.gt.f32.partialorder %v671, %v600
        %vm921 = vcmp.gt.f32.partialorder %v673, %v601
        %vm922 = vcmp.gt.f32.partialorder %v675, %v602
        %vm923 = vcmp.gt.f32.partialorder %v677, %v603
        %vm924 = vcmp.gt.f32.partialorder %v679, %v604
        %vm925 = vcmp.gt.f32.partialorder %v681, %v605
        %vm926 = vcmp.gt.f32.partialorder %v683, %v606
        %vm927 = vcmp.gt.f32.partialorder %v685, %v607
        %vm928 = vcmp.gt.f32.partialorder %v687, %v608
        %vm929 = vcmp.gt.f32.partialorder %v689, %v609
        %vm930 = vcmp.gt.f32.partialorder %v691, %v610
        %vm931 = vcmp.gt.f32.partialorder %v693, %v611
        %vm932 = vcmp.gt.f32.partialorder %v695, %v612
        %vm933 = vcmp.gt.f32.partialorder %v697, %v613
        %vm934 = vcmp.gt.f32.partialorder %v699, %v614
        %vm935 = vcmp.gt.f32.partialorder %v701, %v615
        %vm936 = vcmp.gt.f32.partialorder %v703, %v616
        %vm937 = vcmp.gt.f32.partialorder %v705, %v617
        %vm938 = vcmp.gt.f32.partialorder %v707, %v618
        %vm939 = vcmp.gt.f32.partialorder %v709, %v619
        %vm940 = vcmp.gt.f32.partialorder %v711, %v620
        %vm941 = vcmp.gt.f32.partialorder %v713, %v621
        %vm942 = vcmp.gt.f32.partialorder %v715, %v622
        %vm943 = vcmp.gt.f32.partialorder %v717, %v623
        %vm944 = vcmp.gt.f32.partialorder %v719, %v624
        %vm945 = vcmp.gt.f32.partialorder %v721, %v625
        %vm946 = vcmp.gt.f32.partialorder %v723, %v626
        %vm947 = vcmp.gt.f32.partialorder %v725, %v627
        %vm948 = vcmp.gt.f32.partialorder %v727, %v628
        %vm949 = vcmp.gt.f32.partialorder %v729, %v629
        %vm950 = vcmp.gt.f32.partialorder %v731, %v630
        %vm951 = vcmp.gt.f32.partialorder %v733, %v631
        %vm952 = vcmp.gt.f32.partialorder %v735, %v632
        %vm953 = vcmp.gt.f32.partialorder %v737, %v633
        %vm954 = vcmp.gt.f32.partialorder %v739, %v634
        %vm955 = vcmp.gt.f32.partialorder %v741, %v635
        %vm956 = vcmp.gt.f32.partialorder %v743, %v636
        %vm957 = vcmp.gt.f32.partialorder %v745, %v637
        %vm958 = vcmp.gt.f32.partialorder %v747, %v638
        %vm959 = vcmp.gt.f32.partialorder %v749, %v639
        %vm960 = vcmp.gt.f32.partialorder %v751, %v640
        %vm961 = vcmp.gt.f32.partialorder %v753, %v641
        %vm962 = vcmp.gt.f32.partialorder %v755, %v642
        %vm963 = vcmp.gt.f32.partialorder %v757, %v643
        %vm964 = vcmp.gt.f32.partialorder %v759, %v644
        %vm965 = vcmp.gt.f32.partialorder %v761, %v645
        %vm966 = vcmp.gt.f32.partialorder %v763, %v646
        %vm967 = vcmp.gt.f32.partialorder %v765, %v647
        %vm968 = vcmp.gt.f32.partialorder %v767, %v648
        %vm969 = vcmp.gt.f32.partialorder %v769, %v649
        %vm970 = vcmp.gt.f32.partialorder %v771, %v650
        %vm971 = vcmp.gt.f32.partialorder %v773, %v651
        %vm972 = vcmp.gt.f32.partialorder %v775, %v652
        %vm973 = vcmp.gt.f32.partialorder %v777, %v653
        %vm974 = vcmp.gt.f32.partialorder %v779, %v654
        %vm975 = vcmp.gt.f32.partialorder %v781, %v655
        %vm976 = vcmp.gt.f32.partialorder %v783, %v656
        %vm977 = vcmp.gt.f32.partialorder %v785, %v657
        %v978 = vsel %vm914, %v787, %v530
        %v979 = vsel %vm915, %v789, %v531
        %v980 = vsel %vm916, %v791, %v532
        %v981 = vsel %vm917, %v793, %v533
        %v982 = vsel %vm918, %v795, %v534
        %v983 = vsel %vm919, %v797, %v535
        %v984 = vsel %vm920, %v799, %v536
        %v985 = vsel %vm921, %v801, %v537
        %v986 = vsel %vm922, %v803, %v538
        %v987 = vsel %vm923, %v805, %v539
        %v988 = vsel %vm924, %v807, %v540
        %v989 = vsel %vm925, %v809, %v541
        %v990 = vsel %vm926, %v811, %v542
        %v991 = vsel %vm927, %v813, %v543
        %v992 = vsel %vm928, %v815, %v544
        %v993 = vsel %vm929, %v817, %v545
        %v994 = vsel %vm930, %v819, %v546
        %v995 = vsel %vm931, %v821, %v547
        %v996 = vsel %vm932, %v823, %v548
        %v997 = vsel %vm933, %v825, %v549
        %v998 = vsel %vm934, %v827, %v550
        %v999 = vsel %vm935, %v829, %v551
        %v1000 = vsel %vm936, %v831, %v552
        %v1001 = vsel %vm937, %v833, %v553
        %v1002 = vsel %vm938, %v835, %v554
        %v1003 = vsel %vm939, %v837, %v555
        %v1004 = vsel %vm940, %v839, %v556
        %v1005 = vsel %vm941, %v841, %v557
        %v1006 = vsel %vm942, %v843, %v558
        %v1007 = vsel %vm943, %v845, %v559
        %v1008 = vsel %vm944, %v847, %v560
        %v1009 = vsel %vm945, %v849, %v561
        %v1010 = vsel %vm946, %v851, %v562
        %v1011 = vsel %vm947, %v853, %v563
        %v1012 = vsel %vm948, %v855, %v564
        %v1013 = vsel %vm949, %v857, %v565
        %v1014 = vsel %vm950, %v859, %v566
        %v1015 = vsel %vm951, %v861, %v567
        %v1016 = vsel %vm952, %v863, %v568
        %v1017 = vsel %vm953, %v865, %v569
        %v1018 = vsel %vm954, %v867, %v570
        %v1019 = vsel %vm955, %v869, %v571
        %v1020 = vsel %vm956, %v871, %v572
        %v1021 = vsel %vm957, %v873, %v573
        %v1022 = vsel %vm958, %v875, %v574
        %v1023 = vsel %vm959, %v877, %v575
        %v1024 = vsel %vm960, %v879, %v576
        %v1025 = vsel %vm961, %v881, %v577
        %v1026 = vsel %vm962, %v883, %v578
        %v1027 = vsel %vm963, %v885, %v579
        %v1028 = vsel %vm964, %v887, %v580
        %v1029 = vsel %vm965, %v889, %v581
        %v1030 = vsel %vm966, %v891, %v582
        %v1031 = vsel %vm967, %v893, %v583
        %v1032 = vsel %vm968, %v895, %v584
        %v1033 = vsel %vm969, %v897, %v585
        %v1034 = vsel %vm970, %v899, %v586
        %v1035 = vsel %vm971, %v901, %v587
        %v1036 = vsel %vm972, %v903, %v588
        %v1037 = vsel %vm973, %v905, %v589
        %v1038 = vsel %vm974, %v907, %v590
        %v1039 = vsel %vm975, %v909, %v591
        %v1040 = vsel %vm976, %v911, %v592
        %v1041 = vsel %vm977, %v913, %v593
        %v1042 = vmax.f32 %v594, %v659
        %v1043 = vmax.f32 %v595, %v661
        %v1044 = vmax.f32 %v596, %v663
        %v1045 = vmax.f32 %v597, %v665
        %v1046 = vmax.f32 %v598, %v667
        %v1047 = vmax.f32 %v599, %v669
        %v1048 = vmax.f32 %v600, %v671
        %v1049 = vmax.f32 %v601, %v673
        %v1050 = vmax.f32 %v602, %v675
        %v1051 = vmax.f32 %v603, %v677
        %v1052 = vmax.f32 %v604, %v679
        %v1053 = vmax.f32 %v605, %v681
        %v1054 = vmax.f32 %v606, %v683
        %v1055 = vmax.f32 %v607, %v685
        %v1056 = vmax.f32 %v608, %v687
        %v1057 = vmax.f32 %v609, %v689
        %v1058 = vmax.f32 %v610, %v691
        %v1059 = vmax.f32 %v611, %v693
        %v1060 = vmax.f32 %v612, %v695
        %v1061 = vmax.f32 %v613, %v697
        %v1062 = vmax.f32 %v614, %v699
        %v1063 = vmax.f32 %v615, %v701
        %v1064 = vmax.f32 %v616, %v703
        %v1065 = vmax.f32 %v617, %v705
        %v1066 = vmax.f32 %v618, %v707
        %v1067 = vmax.f32 %v619, %v709
        %v1068 = vmax.f32 %v620, %v711
        %v1069 = vmax.f32 %v621, %v713
        %v1070 = vmax.f32 %v622, %v715
        %v1071 = vmax.f32 %v623, %v717
        %v1072 = vmax.f32 %v624, %v719
        %v1073 = vmax.f32 %v625, %v721
        %v1074 = vmax.f32 %v626, %v723
        %v1075 = vmax.f32 %v627, %v725
        %v1076 = vmax.f32 %v628, %v727
        %v1077 = vmax.f32 %v629, %v729
        %v1078 = vmax.f32 %v630, %v731
        %v1079 = vmax.f32 %v631, %v733
        %v1080 = vmax.f32 %v632, %v735
        %v1081 = vmax.f32 %v633, %v737
        %v1082 = vmax.f32 %v634, %v739
        %v1083 = vmax.f32 %v635, %v741
        %v1084 = vmax.f32 %v636, %v743
        %v1085 = vmax.f32 %v637, %v745
        %v1086 = vmax.f32 %v638, %v747
        %v1087 = vmax.f32 %v639, %v749
        %v1088 = vmax.f32 %v640, %v751
        %v1089 = vmax.f32 %v641, %v753
        %v1090 = vmax.f32 %v642, %v755
        %v1091 = vmax.f32 %v643, %v757
        %v1092 = vmax.f32 %v644, %v759
        %v1093 = vmax.f32 %v645, %v761
        %v1094 = vmax.f32 %v646, %v763
        %v1095 = vmax.f32 %v647, %v765
        %v1096 = vmax.f32 %v648, %v767
        %v1097 = vmax.f32 %v649, %v769
        %v1098 = vmax.f32 %v650, %v771
        %v1099 = vmax.f32 %v651, %v773
        %v1100 = vmax.f32 %v652, %v775
        %v1101 = vmax.f32 %v653, %v777
        %v1102 = vmax.f32 %v654, %v779
        %v1103 = vmax.f32 %v655, %v781
        %v1104 = vmax.f32 %v656, %v783
        %v1105 = vmax.f32 %v657, %v785
        %1106 = vrot.lane.b32.xlu0 %v1042, 124
        %v1107 = vpop.permute.xlu0 %1106
        %1108 = vrot.lane.b32.xlu0 %v1043, 124
        %v1109 = vpop.permute.xlu0 %1108
        %1110 = vrot.lane.b32.xlu0 %v1044, 124
        %v1111 = vpop.permute.xlu0 %1110
        %1112 = vrot.lane.b32.xlu0 %v1045, 124
        %v1113 = vpop.permute.xlu0 %1112
        %1114 = vrot.lane.b32.xlu0 %v1046, 124
        %v1115 = vpop.permute.xlu0 %1114
        %1116 = vrot.lane.b32.xlu0 %v1047, 124
        %v1117 = vpop.permute.xlu0 %1116
        %1118 = vrot.lane.b32.xlu0 %v1048, 124
        %v1119 = vpop.permute.xlu0 %1118
        %1120 = vrot.lane.b32.xlu0 %v1049, 124
        %v1121 = vpop.permute.xlu0 %1120
        %1122 = vrot.lane.b32.xlu0 %v1050, 124
        %v1123 = vpop.permute.xlu0 %1122
        %1124 = vrot.lane.b32.xlu0 %v1051, 124
        %v1125 = vpop.permute.xlu0 %1124
        %1126 = vrot.lane.b32.xlu0 %v1052, 124
        %v1127 = vpop.permute.xlu0 %1126
        %1128 = vrot.lane.b32.xlu0 %v1053, 124
        %v1129 = vpop.permute.xlu0 %1128
        %1130 = vrot.lane.b32.xlu0 %v1054, 124
        %v1131 = vpop.permute.xlu0 %1130
        %1132 = vrot.lane.b32.xlu0 %v1055, 124
        %v1133 = vpop.permute.xlu0 %1132
        %1134 = vrot.lane.b32.xlu0 %v1056, 124
        %v1135 = vpop.permute.xlu0 %1134
        %1136 = vrot.lane.b32.xlu0 %v1057, 124
        %v1137 = vpop.permute.xlu0 %1136
        %1138 = vrot.lane.b32.xlu0 %v1058, 124
        %v1139 = vpop.permute.xlu0 %1138
        %1140 = vrot.lane.b32.xlu0 %v1059, 124
        %v1141 = vpop.permute.xlu0 %1140
        %1142 = vrot.lane.b32.xlu0 %v1060, 124
        %v1143 = vpop.permute.xlu0 %1142
        %1144 = vrot.lane.b32.xlu0 %v1061, 124
        %v1145 = vpop.permute.xlu0 %1144
        %1146 = vrot.lane.b32.xlu0 %v1062, 124
        %v1147 = vpop.permute.xlu0 %1146
        %1148 = vrot.lane.b32.xlu0 %v1063, 124
        %v1149 = vpop.permute.xlu0 %1148
        %1150 = vrot.lane.b32.xlu0 %v1064, 124
        %v1151 = vpop.permute.xlu0 %1150
        %1152 = vrot.lane.b32.xlu0 %v1065, 124
        %v1153 = vpop.permute.xlu0 %1152
        %1154 = vrot.lane.b32.xlu0 %v1066, 124
        %v1155 = vpop.permute.xlu0 %1154
        %1156 = vrot.lane.b32.xlu0 %v1067, 124
        %v1157 = vpop.permute.xlu0 %1156
        %1158 = vrot.lane.b32.xlu0 %v1068, 124
        %v1159 = vpop.permute.xlu0 %1158
        %1160 = vrot.lane.b32.xlu0 %v1069, 124
        %v1161 = vpop.permute.xlu0 %1160
        %1162 = vrot.lane.b32.xlu0 %v1070, 124
        %v1163 = vpop.permute.xlu0 %1162
        %1164 = vrot.lane.b32.xlu0 %v1071, 124
        %v1165 = vpop.permute.xlu0 %1164
        %1166 = vrot.lane.b32.xlu0 %v1072, 124
        %v1167 = vpop.permute.xlu0 %1166
        %1168 = vrot.lane.b32.xlu0 %v1073, 124
        %v1169 = vpop.permute.xlu0 %1168
        %1170 = vrot.lane.b32.xlu0 %v1074, 124
        %v1171 = vpop.permute.xlu0 %1170
        %1172 = vrot.lane.b32.xlu0 %v1075, 124
        %v1173 = vpop.permute.xlu0 %1172
        %1174 = vrot.lane.b32.xlu0 %v1076, 124
        %v1175 = vpop.permute.xlu0 %1174
        %1176 = vrot.lane.b32.xlu0 %v1077, 124
        %v1177 = vpop.permute.xlu0 %1176
        %1178 = vrot.lane.b32.xlu0 %v1078, 124
        %v1179 = vpop.permute.xlu0 %1178
        %1180 = vrot.lane.b32.xlu0 %v1079, 124
        %v1181 = vpop.permute.xlu0 %1180
        %1182 = vrot.lane.b32.xlu0 %v1080, 124
        %v1183 = vpop.permute.xlu0 %1182
        %1184 = vrot.lane.b32.xlu0 %v1081, 124
        %v1185 = vpop.permute.xlu0 %1184
        %1186 = vrot.lane.b32.xlu0 %v1082, 124
        %v1187 = vpop.permute.xlu0 %1186
        %1188 = vrot.lane.b32.xlu0 %v1083, 124
        %v1189 = vpop.permute.xlu0 %1188
        %1190 = vrot.lane.b32.xlu0 %v1084, 124
        %v1191 = vpop.permute.xlu0 %1190
        %1192 = vrot.lane.b32.xlu0 %v1085, 124
        %v1193 = vpop.permute.xlu0 %1192
        %1194 = vrot.lane.b32.xlu0 %v1086, 124
        %v1195 = vpop.permute.xlu0 %1194
        %1196 = vrot.lane.b32.xlu0 %v1087, 124
        %v1197 = vpop.permute.xlu0 %1196
        %1198 = vrot.lane.b32.xlu0 %v1088, 124
        %v1199 = vpop.permute.xlu0 %1198
        %1200 = vrot.lane.b32.xlu0 %v1089, 124
        %v1201 = vpop.permute.xlu0 %1200
        %1202 = vrot.lane.b32.xlu0 %v1090, 124
        %v1203 = vpop.permute.xlu0 %1202
        %1204 = vrot.lane.b32.xlu0 %v1091, 124
        %v1205 = vpop.permute.xlu0 %1204
        %1206 = vrot.lane.b32.xlu0 %v1092, 124
        %v1207 = vpop.permute.xlu0 %1206
        %1208 = vrot.lane.b32.xlu0 %v1093, 124
        %v1209 = vpop.permute.xlu0 %1208
        %1210 = vrot.lane.b32.xlu0 %v1094, 124
        %v1211 = vpop.permute.xlu0 %1210
        %1212 = vrot.lane.b32.xlu0 %v1095, 124
        %v1213 = vpop.permute.xlu0 %1212
        %1214 = vrot.lane.b32.xlu0 %v1096, 124
        %v1215 = vpop.permute.xlu0 %1214
        %1216 = vrot.lane.b32.xlu0 %v1097, 124
        %v1217 = vpop.permute.xlu0 %1216
        %1218 = vrot.lane.b32.xlu0 %v1098, 124
        %v1219 = vpop.permute.xlu0 %1218
        %1220 = vrot.lane.b32.xlu0 %v1099, 124
        %v1221 = vpop.permute.xlu0 %1220
        %1222 = vrot.lane.b32.xlu0 %v1100, 124
        %v1223 = vpop.permute.xlu0 %1222
        %1224 = vrot.lane.b32.xlu0 %v1101, 124
        %v1225 = vpop.permute.xlu0 %1224
        %1226 = vrot.lane.b32.xlu0 %v1102, 124
        %v1227 = vpop.permute.xlu0 %1226
        %1228 = vrot.lane.b32.xlu0 %v1103, 124
        %v1229 = vpop.permute.xlu0 %1228
        %1230 = vrot.lane.b32.xlu0 %v1104, 124
        %v1231 = vpop.permute.xlu0 %1230
        %1232 = vrot.lane.b32.xlu0 %v1105, 124
        %v1233 = vpop.permute.xlu0 %1232
        %1234 = vrot.lane.b32.xlu0 %v978, 124
        %v1235 = vpop.permute.xlu0 %1234
        %1236 = vrot.lane.b32.xlu0 %v979, 124
        %v1237 = vpop.permute.xlu0 %1236
        %1238 = vrot.lane.b32.xlu0 %v980, 124
        %v1239 = vpop.permute.xlu0 %1238
        %1240 = vrot.lane.b32.xlu0 %v981, 124
        %v1241 = vpop.permute.xlu0 %1240
        %1242 = vrot.lane.b32.xlu0 %v982, 124
        %v1243 = vpop.permute.xlu0 %1242
        %1244 = vrot.lane.b32.xlu0 %v983, 124
        %v1245 = vpop.permute.xlu0 %1244
        %1246 = vrot.lane.b32.xlu0 %v984, 124
        %v1247 = vpop.permute.xlu0 %1246
        %1248 = vrot.lane.b32.xlu0 %v985, 124
        %v1249 = vpop.permute.xlu0 %1248
        %1250 = vrot.lane.b32.xlu0 %v986, 124
        %v1251 = vpop.permute.xlu0 %1250
        %1252 = vrot.lane.b32.xlu0 %v987, 124
        %v1253 = vpop.permute.xlu0 %1252
        %1254 = vrot.lane.b32.xlu0 %v988, 124
        %v1255 = vpop.permute.xlu0 %1254
        %1256 = vrot.lane.b32.xlu0 %v989, 124
        %v1257 = vpop.permute.xlu0 %1256
        %1258 = vrot.lane.b32.xlu0 %v990, 124
        %v1259 = vpop.permute.xlu0 %1258
        %1260 = vrot.lane.b32.xlu0 %v991, 124
        %v1261 = vpop.permute.xlu0 %1260
        %1262 = vrot.lane.b32.xlu0 %v992, 124
        %v1263 = vpop.permute.xlu0 %1262
        %1264 = vrot.lane.b32.xlu0 %v993, 124
        %v1265 = vpop.permute.xlu0 %1264
        %1266 = vrot.lane.b32.xlu0 %v994, 124
        %v1267 = vpop.permute.xlu0 %1266
        %1268 = vrot.lane.b32.xlu0 %v995, 124
        %v1269 = vpop.permute.xlu0 %1268
        %1270 = vrot.lane.b32.xlu0 %v996, 124
        %v1271 = vpop.permute.xlu0 %1270
        %1272 = vrot.lane.b32.xlu0 %v997, 124
        %v1273 = vpop.permute.xlu0 %1272
        %1274 = vrot.lane.b32.xlu0 %v998, 124
        %v1275 = vpop.permute.xlu0 %1274
        %1276 = vrot.lane.b32.xlu0 %v999, 124
        %v1277 = vpop.permute.xlu0 %1276
        %1278 = vrot.lane.b32.xlu0 %v1000, 124
        %v1279 = vpop.permute.xlu0 %1278
        %1280 = vrot.lane.b32.xlu0 %v1001, 124
        %v1281 = vpop.permute.xlu0 %1280
        %1282 = vrot.lane.b32.xlu0 %v1002, 124
        %v1283 = vpop.permute.xlu0 %1282
        %1284 = vrot.lane.b32.xlu0 %v1003, 124
        %v1285 = vpop.permute.xlu0 %1284
        %1286 = vrot.lane.b32.xlu0 %v1004, 124
        %v1287 = vpop.permute.xlu0 %1286
        %1288 = vrot.lane.b32.xlu0 %v1005, 124
        %v1289 = vpop.permute.xlu0 %1288
        %1290 = vrot.lane.b32.xlu0 %v1006, 124
        %v1291 = vpop.permute.xlu0 %1290
        %1292 = vrot.lane.b32.xlu0 %v1007, 124
        %v1293 = vpop.permute.xlu0 %1292
        %1294 = vrot.lane.b32.xlu0 %v1008, 124
        %v1295 = vpop.permute.xlu0 %1294
        %1296 = vrot.lane.b32.xlu0 %v1009, 124
        %v1297 = vpop.permute.xlu0 %1296
        %1298 = vrot.lane.b32.xlu0 %v1010, 124
        %v1299 = vpop.permute.xlu0 %1298
        %1300 = vrot.lane.b32.xlu0 %v1011, 124
        %v1301 = vpop.permute.xlu0 %1300
        %1302 = vrot.lane.b32.xlu0 %v1012, 124
        %v1303 = vpop.permute.xlu0 %1302
        %1304 = vrot.lane.b32.xlu0 %v1013, 124
        %v1305 = vpop.permute.xlu0 %1304
        %1306 = vrot.lane.b32.xlu0 %v1014, 124
        %v1307 = vpop.permute.xlu0 %1306
        %1308 = vrot.lane.b32.xlu0 %v1015, 124
        %v1309 = vpop.permute.xlu0 %1308
        %1310 = vrot.lane.b32.xlu0 %v1016, 124
        %v1311 = vpop.permute.xlu0 %1310
        %1312 = vrot.lane.b32.xlu0 %v1017, 124
        %v1313 = vpop.permute.xlu0 %1312
        %1314 = vrot.lane.b32.xlu0 %v1018, 124
        %v1315 = vpop.permute.xlu0 %1314
        %1316 = vrot.lane.b32.xlu0 %v1019, 124
        %v1317 = vpop.permute.xlu0 %1316
        %1318 = vrot.lane.b32.xlu0 %v1020, 124
        %v1319 = vpop.permute.xlu0 %1318
        %1320 = vrot.lane.b32.xlu0 %v1021, 124
        %v1321 = vpop.permute.xlu0 %1320
        %1322 = vrot.lane.b32.xlu0 %v1022, 124
        %v1323 = vpop.permute.xlu0 %1322
        %1324 = vrot.lane.b32.xlu0 %v1023, 124
        %v1325 = vpop.permute.xlu0 %1324
        %1326 = vrot.lane.b32.xlu0 %v1024, 124
        %v1327 = vpop.permute.xlu0 %1326
        %1328 = vrot.lane.b32.xlu0 %v1025, 124
        %v1329 = vpop.permute.xlu0 %1328
        %1330 = vrot.lane.b32.xlu0 %v1026, 124
        %v1331 = vpop.permute.xlu0 %1330
        %1332 = vrot.lane.b32.xlu0 %v1027, 124
        %v1333 = vpop.permute.xlu0 %1332
        %1334 = vrot.lane.b32.xlu0 %v1028, 124
        %v1335 = vpop.permute.xlu0 %1334
        %1336 = vrot.lane.b32.xlu0 %v1029, 124
        %v1337 = vpop.permute.xlu0 %1336
        %1338 = vrot.lane.b32.xlu0 %v1030, 124
        %v1339 = vpop.permute.xlu0 %1338
        %1340 = vrot.lane.b32.xlu0 %v1031, 124
        %v1341 = vpop.permute.xlu0 %1340
        %1342 = vrot.lane.b32.xlu0 %v1032, 124
        %v1343 = vpop.permute.xlu0 %1342
        %1344 = vrot.lane.b32.xlu0 %v1033, 124
        %v1345 = vpop.permute.xlu0 %1344
        %1346 = vrot.lane.b32.xlu0 %v1034, 124
        %v1347 = vpop.permute.xlu0 %1346
        %1348 = vrot.lane.b32.xlu0 %v1035, 124
        %v1349 = vpop.permute.xlu0 %1348
        %1350 = vrot.lane.b32.xlu0 %v1036, 124
        %v1351 = vpop.permute.xlu0 %1350
        %1352 = vrot.lane.b32.xlu0 %v1037, 124
        %v1353 = vpop.permute.xlu0 %1352
        %1354 = vrot.lane.b32.xlu0 %v1038, 124
        %v1355 = vpop.permute.xlu0 %1354
        %1356 = vrot.lane.b32.xlu0 %v1039, 124
        %v1357 = vpop.permute.xlu0 %1356
        %1358 = vrot.lane.b32.xlu0 %v1040, 124
        %v1359 = vpop.permute.xlu0 %1358
        %1360 = vrot.lane.b32.xlu0 %v1041, 124
        %v1361 = vpop.permute.xlu0 %1360
        %vm1362 = vcmp.gt.f32.partialorder %v1107, %v1042
        %vm1363 = vcmp.gt.f32.partialorder %v1109, %v1043
        %vm1364 = vcmp.gt.f32.partialorder %v1111, %v1044
        %vm1365 = vcmp.gt.f32.partialorder %v1113, %v1045
        %vm1366 = vcmp.gt.f32.partialorder %v1115, %v1046
        %vm1367 = vcmp.gt.f32.partialorder %v1117, %v1047
        %vm1368 = vcmp.gt.f32.partialorder %v1119, %v1048
        %vm1369 = vcmp.gt.f32.partialorder %v1121, %v1049
        %vm1370 = vcmp.gt.f32.partialorder %v1123, %v1050
        %vm1371 = vcmp.gt.f32.partialorder %v1125, %v1051
        %vm1372 = vcmp.gt.f32.partialorder %v1127, %v1052
        %vm1373 = vcmp.gt.f32.partialorder %v1129, %v1053
        %vm1374 = vcmp.gt.f32.partialorder %v1131, %v1054
        %vm1375 = vcmp.gt.f32.partialorder %v1133, %v1055
        %vm1376 = vcmp.gt.f32.partialorder %v1135, %v1056
        %vm1377 = vcmp.gt.f32.partialorder %v1137, %v1057
        %vm1378 = vcmp.gt.f32.partialorder %v1139, %v1058
        %vm1379 = vcmp.gt.f32.partialorder %v1141, %v1059
        %vm1380 = vcmp.gt.f32.partialorder %v1143, %v1060
        %vm1381 = vcmp.gt.f32.partialorder %v1145, %v1061
        %vm1382 = vcmp.gt.f32.partialorder %v1147, %v1062
        %vm1383 = vcmp.gt.f32.partialorder %v1149, %v1063
        %vm1384 = vcmp.gt.f32.partialorder %v1151, %v1064
        %vm1385 = vcmp.gt.f32.partialorder %v1153, %v1065
        %vm1386 = vcmp.gt.f32.partialorder %v1155, %v1066
        %vm1387 = vcmp.gt.f32.partialorder %v1157, %v1067
        %vm1388 = vcmp.gt.f32.partialorder %v1159, %v1068
        %vm1389 = vcmp.gt.f32.partialorder %v1161, %v1069
        %vm1390 = vcmp.gt.f32.partialorder %v1163, %v1070
        %vm1391 = vcmp.gt.f32.partialorder %v1165, %v1071
        %vm1392 = vcmp.gt.f32.partialorder %v1167, %v1072
        %vm1393 = vcmp.gt.f32.partialorder %v1169, %v1073
        %vm1394 = vcmp.gt.f32.partialorder %v1171, %v1074
        %vm1395 = vcmp.gt.f32.partialorder %v1173, %v1075
        %vm1396 = vcmp.gt.f32.partialorder %v1175, %v1076
        %vm1397 = vcmp.gt.f32.partialorder %v1177, %v1077
        %vm1398 = vcmp.gt.f32.partialorder %v1179, %v1078
        %vm1399 = vcmp.gt.f32.partialorder %v1181, %v1079
        %vm1400 = vcmp.gt.f32.partialorder %v1183, %v1080
        %vm1401 = vcmp.gt.f32.partialorder %v1185, %v1081
        %vm1402 = vcmp.gt.f32.partialorder %v1187, %v1082
        %vm1403 = vcmp.gt.f32.partialorder %v1189, %v1083
        %vm1404 = vcmp.gt.f32.partialorder %v1191, %v1084
        %vm1405 = vcmp.gt.f32.partialorder %v1193, %v1085
        %vm1406 = vcmp.gt.f32.partialorder %v1195, %v1086
        %vm1407 = vcmp.gt.f32.partialorder %v1197, %v1087
        %vm1408 = vcmp.gt.f32.partialorder %v1199, %v1088
        %vm1409 = vcmp.gt.f32.partialorder %v1201, %v1089
        %vm1410 = vcmp.gt.f32.partialorder %v1203, %v1090
        %vm1411 = vcmp.gt.f32.partialorder %v1205, %v1091
        %vm1412 = vcmp.gt.f32.partialorder %v1207, %v1092
        %vm1413 = vcmp.gt.f32.partialorder %v1209, %v1093
        %vm1414 = vcmp.gt.f32.partialorder %v1211, %v1094
        %vm1415 = vcmp.gt.f32.partialorder %v1213, %v1095
        %vm1416 = vcmp.gt.f32.partialorder %v1215, %v1096
        %vm1417 = vcmp.gt.f32.partialorder %v1217, %v1097
        %vm1418 = vcmp.gt.f32.partialorder %v1219, %v1098
        %vm1419 = vcmp.gt.f32.partialorder %v1221, %v1099
        %vm1420 = vcmp.gt.f32.partialorder %v1223, %v1100
        %vm1421 = vcmp.gt.f32.partialorder %v1225, %v1101
        %vm1422 = vcmp.gt.f32.partialorder %v1227, %v1102
        %vm1423 = vcmp.gt.f32.partialorder %v1229, %v1103
        %vm1424 = vcmp.gt.f32.partialorder %v1231, %v1104
        %vm1425 = vcmp.gt.f32.partialorder %v1233, %v1105
        %v1426 = vsel %vm1362, %v1235, %v978
        %v1427 = vsel %vm1363, %v1237, %v979
        %v1428 = vsel %vm1364, %v1239, %v980
        %v1429 = vsel %vm1365, %v1241, %v981
        %v1430 = vsel %vm1366, %v1243, %v982
        %v1431 = vsel %vm1367, %v1245, %v983
        %v1432 = vsel %vm1368, %v1247, %v984
        %v1433 = vsel %vm1369, %v1249, %v985
        %v1434 = vsel %vm1370, %v1251, %v986
        %v1435 = vsel %vm1371, %v1253, %v987
        %v1436 = vsel %vm1372, %v1255, %v988
        %v1437 = vsel %vm1373, %v1257, %v989
        %v1438 = vsel %vm1374, %v1259, %v990
        %v1439 = vsel %vm1375, %v1261, %v991
        %v1440 = vsel %vm1376, %v1263, %v992
        %v1441 = vsel %vm1377, %v1265, %v993
        %v1442 = vsel %vm1378, %v1267, %v994
        %v1443 = vsel %vm1379, %v1269, %v995
        %v1444 = vsel %vm1380, %v1271, %v996
        %v1445 = vsel %vm1381, %v1273, %v997
        %v1446 = vsel %vm1382, %v1275, %v998
        %v1447 = vsel %vm1383, %v1277, %v999
        %v1448 = vsel %vm1384, %v1279, %v1000
        %v1449 = vsel %vm1385, %v1281, %v1001
        %v1450 = vsel %vm1386, %v1283, %v1002
        %v1451 = vsel %vm1387, %v1285, %v1003
        %v1452 = vsel %vm1388, %v1287, %v1004
        %v1453 = vsel %vm1389, %v1289, %v1005
        %v1454 = vsel %vm1390, %v1291, %v1006
        %v1455 = vsel %vm1391, %v1293, %v1007
        %v1456 = vsel %vm1392, %v1295, %v1008
        %v1457 = vsel %vm1393, %v1297, %v1009
        %v1458 = vsel %vm1394, %v1299, %v1010
        %v1459 = vsel %vm1395, %v1301, %v1011
        %v1460 = vsel %vm1396, %v1303, %v1012
        %v1461 = vsel %vm1397, %v1305, %v1013
        %v1462 = vsel %vm1398, %v1307, %v1014
        %v1463 = vsel %vm1399, %v1309, %v1015
        %v1464 = vsel %vm1400, %v1311, %v1016
        %v1465 = vsel %vm1401, %v1313, %v1017
        %v1466 = vsel %vm1402, %v1315, %v1018
        %v1467 = vsel %vm1403, %v1317, %v1019
        %v1468 = vsel %vm1404, %v1319, %v1020
        %v1469 = vsel %vm1405, %v1321, %v1021
        %v1470 = vsel %vm1406, %v1323, %v1022
        %v1471 = vsel %vm1407, %v1325, %v1023
        %v1472 = vsel %vm1408, %v1327, %v1024
        %v1473 = vsel %vm1409, %v1329, %v1025
        %v1474 = vsel %vm1410, %v1331, %v1026
        %v1475 = vsel %vm1411, %v1333, %v1027
        %v1476 = vsel %vm1412, %v1335, %v1028
        %v1477 = vsel %vm1413, %v1337, %v1029
        %v1478 = vsel %vm1414, %v1339, %v1030
        %v1479 = vsel %vm1415, %v1341, %v1031
        %v1480 = vsel %vm1416, %v1343, %v1032
        %v1481 = vsel %vm1417, %v1345, %v1033
        %v1482 = vsel %vm1418, %v1347, %v1034
        %v1483 = vsel %vm1419, %v1349, %v1035
        %v1484 = vsel %vm1420, %v1351, %v1036
        %v1485 = vsel %vm1421, %v1353, %v1037
        %v1486 = vsel %vm1422, %v1355, %v1038
        %v1487 = vsel %vm1423, %v1357, %v1039
        %v1488 = vsel %vm1424, %v1359, %v1040
        %v1489 = vsel %vm1425, %v1361, %v1041
        %v1490 = vlaneseq
        %v1491 = vshrl.u32 %v1490, 7
        %v1492 = vadd.s32 %v1491, 8
        %v1493 = vadd.s32 %v1491, 16
        %v1494 = vadd.s32 %v1491, 24
        %v1495 = vadd.s32 %v1491, 32
        %v1496 = vadd.s32 %v1491, 40
        %v1497 = vadd.s32 %v1491, 48
        %v1498 = vadd.s32 %v1491, 56
        %v1499 = vadd.s32 %v1491, 64
        %v1500 = vadd.s32 %v1491, 72
        %v1501 = vadd.s32 %v1491, 80
        %v1502 = vadd.s32 %v1491, 88
        %v1503 = vadd.s32 %v1491, 96
        %v1504 = vadd.s32 %v1491, 104
        %v1505 = vadd.s32 %v1491, 112
        %v1506 = vadd.s32 %v1491, 120
        %v1507 = vmul.u32 %v332, 8
        %vm1508 = vcmp.eq.s32.totalorder %v1491, %v1507
        %vm1509 = vcmp.eq.s32.totalorder %v1492, %v1507
        %vm1510 = vcmp.eq.s32.totalorder %v1493, %v1507
        %vm1511 = vcmp.eq.s32.totalorder %v1494, %v1507
        %vm1512 = vcmp.eq.s32.totalorder %v1495, %v1507
        %vm1513 = vcmp.eq.s32.totalorder %v1496, %v1507
        %vm1514 = vcmp.eq.s32.totalorder %v1497, %v1507
        %vm1515 = vcmp.eq.s32.totalorder %v1498, %v1507
        %vm1516 = vcmp.eq.s32.totalorder %v1499, %v1507
        %vm1517 = vcmp.eq.s32.totalorder %v1500, %v1507
        %vm1518 = vcmp.eq.s32.totalorder %v1501, %v1507
        %vm1519 = vcmp.eq.s32.totalorder %v1502, %v1507
        %vm1520 = vcmp.eq.s32.totalorder %v1503, %v1507
        %vm1521 = vcmp.eq.s32.totalorder %v1504, %v1507
        %vm1522 = vcmp.eq.s32.totalorder %v1505, %v1507
        %vm1523 = vcmp.eq.s32.totalorder %v1506, %v1507
        %v1524 = vsel %vm1508, 1, 0
        %v1525 = vsel %vm1509, 1, 0
        %v1526 = vsel %vm1510, 1, 0
        %v1527 = vsel %vm1511, 1, 0
        %v1528 = vsel %vm1512, 1, 0
        %v1529 = vsel %vm1513, 1, 0
        %v1530 = vsel %vm1514, 1, 0
        %v1531 = vsel %vm1515, 1, 0
        %v1532 = vsel %vm1516, 1, 0
        %v1533 = vsel %vm1517, 1, 0
        %v1534 = vsel %vm1518, 1, 0
        %v1535 = vsel %vm1519, 1, 0
        %v1536 = vsel %vm1520, 1, 0
        %v1537 = vsel %vm1521, 1, 0
        %v1538 = vsel %vm1522, 1, 0
        %v1539 = vsel %vm1523, 1, 0
        %v1540 = vcvt.s32.f32 %v1524
        %v1541 = vcvt.s32.f32 %v1525
        %v1542 = vcvt.s32.f32 %v1526
        %v1543 = vcvt.s32.f32 %v1527
        %v1544 = vcvt.s32.f32 %v1528
        %v1545 = vcvt.s32.f32 %v1529
        %v1546 = vcvt.s32.f32 %v1530
        %v1547 = vcvt.s32.f32 %v1531
        %v1548 = vcvt.s32.f32 %v1532
        %v1549 = vcvt.s32.f32 %v1533
        %v1550 = vcvt.s32.f32 %v1534
        %v1551 = vcvt.s32.f32 %v1535
        %v1552 = vcvt.s32.f32 %v1536
        %v1553 = vcvt.s32.f32 %v1537
        %v1554 = vcvt.s32.f32 %v1538
        %v1555 = vcvt.s32.f32 %v1539
        %1556 = vmatprep.subr.mxu0 0.0
        %1557 = vmatpush1.msra.mxu0 %v1555
        %1558 = vmatprep.subr.mxu0 0.0
        %1559 = vmatpush1.msra.mxu0 %v1554
        %1560 = vmatprep.subr.mxu0 0.0
        %1561 = vmatpush1.msra.mxu0 %v1553
        %1562 = vmatprep.subr.mxu0 0.0
        %1563 = vmatpush1.msra.mxu0 %v1552
        %1564 = vmatprep.subr.mxu0 0.0
        %1565 = vmatpush1.msra.mxu0 %v1551
        %1566 = vmatprep.subr.mxu0 0.0
        %1567 = vmatpush1.msra.mxu0 %v1550
        %1568 = vmatprep.subr.mxu0 0.0
        %1569 = vmatpush1.msra.mxu0 %v1549
        %1570 = vmatprep.subr.mxu0 0.0
        %1571 = vmatpush1.msra.mxu0 %v1548
        %1572 = vmatprep.subr.mxu0 0.0
        %1573 = vmatpush1.msra.mxu0 %v1547
        %1574 = vmatprep.subr.mxu0 0.0
        %1575 = vmatpush1.msra.mxu0 %v1546
        %1576 = vmatprep.subr.mxu0 0.0
        %1577 = vmatpush1.msra.mxu0 %v1545
        %1578 = vmatprep.subr.mxu0 0.0
        %1579 = vmatpush1.msra.mxu0 %v1544
        %1580 = vmatprep.subr.mxu0 0.0
        %1581 = vmatpush1.msra.mxu0 %v1543
        %1582 = vmatprep.subr.mxu0 0.0
        %1583 = vmatpush1.msra.mxu0 %v1542
        %1584 = vmatprep.subr.mxu0 0.0
        %1585 = vmatpush1.msra.mxu0 %v1541
        %1586 = vmatprep.subr.mxu0 0.0
        %1587 = vmatpush1.msra.mxu0 %v1540
        %1588 = vmatprep.subr.mxu0 0.0
        %1589 = vmatpush2.msra.mxu0 0.0
        %1590 = vmatprep.subr.mxu0 0.0
        %1591 = vmatpush2.msra.mxu0 0.0
        %1592 = vmatprep.subr.mxu0 0.0
        %1593 = vmatpush2.msra.mxu0 0.0
        %1594 = vmatprep.subr.mxu0 0.0
        %1595 = vmatpush2.msra.mxu0 0.0
        %1596 = vmatprep.subr.mxu0 0.0
        %1597 = vmatpush2.msra.mxu0 0.0
        %1598 = vmatprep.subr.mxu0 0.0
        %1599 = vmatpush2.msra.mxu0 0.0
        %1600 = vmatprep.subr.mxu0 0.0
        %1601 = vmatpush2.msra.mxu0 0.0
        %1602 = vmatprep.subr.mxu0 0.0
        %1603 = vmatpush2.msra.mxu0 0.0
        %1604 = vmatprep.subr.mxu0 0.0
        %1605 = vmatpush2.msra.mxu0 0.0
        %1606 = vmatprep.subr.mxu0 0.0
        %1607 = vmatpush2.msra.mxu0 0.0
        %1608 = vmatprep.subr.mxu0 0.0
        %1609 = vmatpush2.msra.mxu0 0.0
        %1610 = vmatprep.subr.mxu0 0.0
        %1611 = vmatpush2.msra.mxu0 0.0
        %1612 = vmatprep.subr.mxu0 0.0
        %1613 = vmatpush2.msra.mxu0 0.0
        %1614 = vmatprep.subr.mxu0 0.0
        %1615 = vmatpush2.msra.mxu0 0.0
        %1616 = vmatprep.subr.mxu0 0.0
        %1617 = vmatpush2.msra.mxu0 0.0
        %1618 = vmatprep.subr.mxu0 0.0
        %1619 = vmatpush2.msra.mxu0 0.0
        %1620 = vmatprep.mubr.f32.mxu0 0.0
        %1621 = vmatmul.mubr.f32.gmra.mxu0 %v1426
        %v1622 = vpop.f32.mrf.mxu0
        %v1623 = vadd.f32 0.0, %v1622
        %v1624 = vpop.f32.mrf.mxu0
        %1625 = vmatprep.mubr.f32.mxu0 0.0
        %1626 = vmatmul.mubr.f32.gmra.mxu0 %v1427
        %v1627 = vpop.f32.mrf.mxu0
        %v1628 = vadd.f32 0.0, %v1627
        %v1629 = vpop.f32.mrf.mxu0
        %1630 = vmatprep.mubr.f32.mxu0 0.0
        %1631 = vmatmul.mubr.f32.gmra.mxu0 %v1428
        %v1632 = vpop.f32.mrf.mxu0
        %v1633 = vadd.f32 0.0, %v1632
        %v1634 = vpop.f32.mrf.mxu0
        %1635 = vmatprep.mubr.f32.mxu0 0.0
        %1636 = vmatmul.mubr.f32.gmra.mxu0 %v1429
        %v1637 = vpop.f32.mrf.mxu0
        %v1638 = vadd.f32 0.0, %v1637
        %v1639 = vpop.f32.mrf.mxu0
        %1640 = vmatprep.mubr.f32.mxu0 0.0
        %1641 = vmatmul.mubr.f32.gmra.mxu0 %v1430
        %v1642 = vpop.f32.mrf.mxu0
        %v1643 = vadd.f32 0.0, %v1642
        %v1644 = vpop.f32.mrf.mxu0
        %1645 = vmatprep.mubr.f32.mxu0 0.0
        %1646 = vmatmul.mubr.f32.gmra.mxu0 %v1431
        %v1647 = vpop.f32.mrf.mxu0
        %v1648 = vadd.f32 0.0, %v1647
        %v1649 = vpop.f32.mrf.mxu0
        %1650 = vmatprep.mubr.f32.mxu0 0.0
        %1651 = vmatmul.mubr.f32.gmra.mxu0 %v1432
        %v1652 = vpop.f32.mrf.mxu0
        %v1653 = vadd.f32 0.0, %v1652
        %v1654 = vpop.f32.mrf.mxu0
        %1655 = vmatprep.mubr.f32.mxu0 0.0
        %1656 = vmatmul.mubr.f32.gmra.mxu0 %v1433
        %v1657 = vpop.f32.mrf.mxu0
        %v1658 = vadd.f32 0.0, %v1657
        %v1659 = vpop.f32.mrf.mxu0
        %1660 = vmatprep.mubr.f32.mxu0 0.0
        %1661 = vmatmul.mubr.f32.gmra.mxu0 %v1434
        %v1662 = vpop.f32.mrf.mxu0
        %v1663 = vadd.f32 0.0, %v1662
        %v1664 = vpop.f32.mrf.mxu0
        %1665 = vmatprep.mubr.f32.mxu0 0.0
        %1666 = vmatmul.mubr.f32.gmra.mxu0 %v1435
        %v1667 = vpop.f32.mrf.mxu0
        %v1668 = vadd.f32 0.0, %v1667
        %v1669 = vpop.f32.mrf.mxu0
        %1670 = vmatprep.mubr.f32.mxu0 0.0
        %1671 = vmatmul.mubr.f32.gmra.mxu0 %v1436
        %v1672 = vpop.f32.mrf.mxu0
        %v1673 = vadd.f32 0.0, %v1672
        %v1674 = vpop.f32.mrf.mxu0
        %1675 = vmatprep.mubr.f32.mxu0 0.0
        %1676 = vmatmul.mubr.f32.gmra.mxu0 %v1437
        %v1677 = vpop.f32.mrf.mxu0
        %v1678 = vadd.f32 0.0, %v1677
        %v1679 = vpop.f32.mrf.mxu0
        %1680 = vmatprep.mubr.f32.mxu0 0.0
        %1681 = vmatmul.mubr.f32.gmra.mxu0 %v1438
        %v1682 = vpop.f32.mrf.mxu0
        %v1683 = vadd.f32 0.0, %v1682
        %v1684 = vpop.f32.mrf.mxu0
        %1685 = vmatprep.mubr.f32.mxu0 0.0
        %1686 = vmatmul.mubr.f32.gmra.mxu0 %v1439
        %v1687 = vpop.f32.mrf.mxu0
        %v1688 = vadd.f32 0.0, %v1687
        %v1689 = vpop.f32.mrf.mxu0
        %1690 = vmatprep.mubr.f32.mxu0 0.0
        %1691 = vmatmul.mubr.f32.gmra.mxu0 %v1440
        %v1692 = vpop.f32.mrf.mxu0
        %v1693 = vadd.f32 0.0, %v1692
        %v1694 = vpop.f32.mrf.mxu0
        %1695 = vmatprep.mubr.f32.mxu0 0.0
        %1696 = vmatmul.mubr.f32.gmra.mxu0 %v1441
        %v1697 = vpop.f32.mrf.mxu0
        %v1698 = vadd.f32 0.0, %v1697
        %v1699 = vpop.f32.mrf.mxu0
        %1700 = vmatprep.mubr.f32.mxu0 0.0
        %1701 = vmatmul.mubr.f32.gmra.mxu0 %v1442
        %v1702 = vpop.f32.mrf.mxu0
        %v1703 = vadd.f32 0.0, %v1702
        %v1704 = vpop.f32.mrf.mxu0
        %1705 = vmatprep.mubr.f32.mxu0 0.0
        %1706 = vmatmul.mubr.f32.gmra.mxu0 %v1443
        %v1707 = vpop.f32.mrf.mxu0
        %v1708 = vadd.f32 0.0, %v1707
        %v1709 = vpop.f32.mrf.mxu0
        %1710 = vmatprep.mubr.f32.mxu0 0.0
        %1711 = vmatmul.mubr.f32.gmra.mxu0 %v1444
        %v1712 = vpop.f32.mrf.mxu0
        %v1713 = vadd.f32 0.0, %v1712
        %v1714 = vpop.f32.mrf.mxu0
        %1715 = vmatprep.mubr.f32.mxu0 0.0
        %1716 = vmatmul.mubr.f32.gmra.mxu0 %v1445
        %v1717 = vpop.f32.mrf.mxu0
        %v1718 = vadd.f32 0.0, %v1717
        %v1719 = vpop.f32.mrf.mxu0
        %1720 = vmatprep.mubr.f32.mxu0 0.0
        %1721 = vmatmul.mubr.f32.gmra.mxu0 %v1446
        %v1722 = vpop.f32.mrf.mxu0
        %v1723 = vadd.f32 0.0, %v1722
        %v1724 = vpop.f32.mrf.mxu0
        %1725 = vmatprep.mubr.f32.mxu0 0.0
        %1726 = vmatmul.mubr.f32.gmra.mxu0 %v1447
        %v1727 = vpop.f32.mrf.mxu0
        %v1728 = vadd.f32 0.0, %v1727
        %v1729 = vpop.f32.mrf.mxu0
        %1730 = vmatprep.mubr.f32.mxu0 0.0
        %1731 = vmatmul.mubr.f32.gmra.mxu0 %v1448
        %v1732 = vpop.f32.mrf.mxu0
        %v1733 = vadd.f32 0.0, %v1732
        %v1734 = vpop.f32.mrf.mxu0
        %1735 = vmatprep.mubr.f32.mxu0 0.0
        %1736 = vmatmul.mubr.f32.gmra.mxu0 %v1449
        %v1737 = vpop.f32.mrf.mxu0
        %v1738 = vadd.f32 0.0, %v1737
        %v1739 = vpop.f32.mrf.mxu0
        %1740 = vmatprep.mubr.f32.mxu0 0.0
        %1741 = vmatmul.mubr.f32.gmra.mxu0 %v1450
        %v1742 = vpop.f32.mrf.mxu0
        %v1743 = vadd.f32 0.0, %v1742
        %v1744 = vpop.f32.mrf.mxu0
        %1745 = vmatprep.mubr.f32.mxu0 0.0
        %1746 = vmatmul.mubr.f32.gmra.mxu0 %v1451
        %v1747 = vpop.f32.mrf.mxu0
        %v1748 = vadd.f32 0.0, %v1747
        %v1749 = vpop.f32.mrf.mxu0
        %1750 = vmatprep.mubr.f32.mxu0 0.0
        %1751 = vmatmul.mubr.f32.gmra.mxu0 %v1452
        %v1752 = vpop.f32.mrf.mxu0
        %v1753 = vadd.f32 0.0, %v1752
        %v1754 = vpop.f32.mrf.mxu0
        %1755 = vmatprep.mubr.f32.mxu0 0.0
        %1756 = vmatmul.mubr.f32.gmra.mxu0 %v1453
        %v1757 = vpop.f32.mrf.mxu0
        %v1758 = vadd.f32 0.0, %v1757
        %v1759 = vpop.f32.mrf.mxu0
        %1760 = vmatprep.mubr.f32.mxu0 0.0
        %1761 = vmatmul.mubr.f32.gmra.mxu0 %v1454
        %v1762 = vpop.f32.mrf.mxu0
        %v1763 = vadd.f32 0.0, %v1762
        %v1764 = vpop.f32.mrf.mxu0
        %1765 = vmatprep.mubr.f32.mxu0 0.0
        %1766 = vmatmul.mubr.f32.gmra.mxu0 %v1455
        %v1767 = vpop.f32.mrf.mxu0
        %v1768 = vadd.f32 0.0, %v1767
        %v1769 = vpop.f32.mrf.mxu0
        %1770 = vmatprep.mubr.f32.mxu0 0.0
        %1771 = vmatmul.mubr.f32.gmra.mxu0 %v1456
        %v1772 = vpop.f32.mrf.mxu0
        %v1773 = vadd.f32 0.0, %v1772
        %v1774 = vpop.f32.mrf.mxu0
        %1775 = vmatprep.mubr.f32.mxu0 0.0
        %1776 = vmatmul.mubr.f32.gmra.mxu0 %v1457
        %v1777 = vpop.f32.mrf.mxu0
        %v1778 = vadd.f32 0.0, %v1777
        %v1779 = vpop.f32.mrf.mxu0
        %1780 = vmatprep.mubr.f32.mxu0 0.0
        %1781 = vmatmul.mubr.f32.gmra.mxu0 %v1458
        %v1782 = vpop.f32.mrf.mxu0
        %v1783 = vadd.f32 0.0, %v1782
        %v1784 = vpop.f32.mrf.mxu0
        %1785 = vmatprep.mubr.f32.mxu0 0.0
        %1786 = vmatmul.mubr.f32.gmra.mxu0 %v1459
        %v1787 = vpop.f32.mrf.mxu0
        %v1788 = vadd.f32 0.0, %v1787
        %v1789 = vpop.f32.mrf.mxu0
        %1790 = vmatprep.mubr.f32.mxu0 0.0
        %1791 = vmatmul.mubr.f32.gmra.mxu0 %v1460
        %v1792 = vpop.f32.mrf.mxu0
        %v1793 = vadd.f32 0.0, %v1792
        %v1794 = vpop.f32.mrf.mxu0
        %1795 = vmatprep.mubr.f32.mxu0 0.0
        %1796 = vmatmul.mubr.f32.gmra.mxu0 %v1461
        %v1797 = vpop.f32.mrf.mxu0
        %v1798 = vadd.f32 0.0, %v1797
        %v1799 = vpop.f32.mrf.mxu0
        %1800 = vmatprep.mubr.f32.mxu0 0.0
        %1801 = vmatmul.mubr.f32.gmra.mxu0 %v1462
        %v1802 = vpop.f32.mrf.mxu0
        %v1803 = vadd.f32 0.0, %v1802
        %v1804 = vpop.f32.mrf.mxu0
        %1805 = vmatprep.mubr.f32.mxu0 0.0
        %1806 = vmatmul.mubr.f32.gmra.mxu0 %v1463
        %v1807 = vpop.f32.mrf.mxu0
        %v1808 = vadd.f32 0.0, %v1807
        %v1809 = vpop.f32.mrf.mxu0
        %1810 = vmatprep.mubr.f32.mxu0 0.0
        %1811 = vmatmul.mubr.f32.gmra.mxu0 %v1464
        %v1812 = vpop.f32.mrf.mxu0
        %v1813 = vadd.f32 0.0, %v1812
        %v1814 = vpop.f32.mrf.mxu0
        %1815 = vmatprep.mubr.f32.mxu0 0.0
        %1816 = vmatmul.mubr.f32.gmra.mxu0 %v1465
        %v1817 = vpop.f32.mrf.mxu0
        %v1818 = vadd.f32 0.0, %v1817
        %v1819 = vpop.f32.mrf.mxu0
        %1820 = vmatprep.mubr.f32.mxu0 0.0
        %1821 = vmatmul.mubr.f32.gmra.mxu0 %v1466
        %v1822 = vpop.f32.mrf.mxu0
        %v1823 = vadd.f32 0.0, %v1822
        %v1824 = vpop.f32.mrf.mxu0
        %1825 = vmatprep.mubr.f32.mxu0 0.0
        %1826 = vmatmul.mubr.f32.gmra.mxu0 %v1467
        %v1827 = vpop.f32.mrf.mxu0
        %v1828 = vadd.f32 0.0, %v1827
        %v1829 = vpop.f32.mrf.mxu0
        %1830 = vmatprep.mubr.f32.mxu0 0.0
        %1831 = vmatmul.mubr.f32.gmra.mxu0 %v1468
        %v1832 = vpop.f32.mrf.mxu0
        %v1833 = vadd.f32 0.0, %v1832
        %v1834 = vpop.f32.mrf.mxu0
        %1835 = vmatprep.mubr.f32.mxu0 0.0
        %1836 = vmatmul.mubr.f32.gmra.mxu0 %v1469
        %v1837 = vpop.f32.mrf.mxu0
        %v1838 = vadd.f32 0.0, %v1837
        %v1839 = vpop.f32.mrf.mxu0
        %1840 = vmatprep.mubr.f32.mxu0 0.0
        %1841 = vmatmul.mubr.f32.gmra.mxu0 %v1470
        %v1842 = vpop.f32.mrf.mxu0
        %v1843 = vadd.f32 0.0, %v1842
        %v1844 = vpop.f32.mrf.mxu0
        %1845 = vmatprep.mubr.f32.mxu0 0.0
        %1846 = vmatmul.mubr.f32.gmra.mxu0 %v1471
        %v1847 = vpop.f32.mrf.mxu0
        %v1848 = vadd.f32 0.0, %v1847
        %v1849 = vpop.f32.mrf.mxu0
        %1850 = vmatprep.mubr.f32.mxu0 0.0
        %1851 = vmatmul.mubr.f32.gmra.mxu0 %v1472
        %v1852 = vpop.f32.mrf.mxu0
        %v1853 = vadd.f32 0.0, %v1852
        %v1854 = vpop.f32.mrf.mxu0
        %1855 = vmatprep.mubr.f32.mxu0 0.0
        %1856 = vmatmul.mubr.f32.gmra.mxu0 %v1473
        %v1857 = vpop.f32.mrf.mxu0
        %v1858 = vadd.f32 0.0, %v1857
        %v1859 = vpop.f32.mrf.mxu0
        %1860 = vmatprep.mubr.f32.mxu0 0.0
        %1861 = vmatmul.mubr.f32.gmra.mxu0 %v1474
        %v1862 = vpop.f32.mrf.mxu0
        %v1863 = vadd.f32 0.0, %v1862
        %v1864 = vpop.f32.mrf.mxu0
        %1865 = vmatprep.mubr.f32.mxu0 0.0
        %1866 = vmatmul.mubr.f32.gmra.mxu0 %v1475
        %v1867 = vpop.f32.mrf.mxu0
        %v1868 = vadd.f32 0.0, %v1867
        %v1869 = vpop.f32.mrf.mxu0
        %1870 = vmatprep.mubr.f32.mxu0 0.0
        %1871 = vmatmul.mubr.f32.gmra.mxu0 %v1476
        %v1872 = vpop.f32.mrf.mxu0
        %v1873 = vadd.f32 0.0, %v1872
        %v1874 = vpop.f32.mrf.mxu0
        %1875 = vmatprep.mubr.f32.mxu0 0.0
        %1876 = vmatmul.mubr.f32.gmra.mxu0 %v1477
        %v1877 = vpop.f32.mrf.mxu0
        %v1878 = vadd.f32 0.0, %v1877
        %v1879 = vpop.f32.mrf.mxu0
        %1880 = vmatprep.mubr.f32.mxu0 0.0
        %1881 = vmatmul.mubr.f32.gmra.mxu0 %v1478
        %v1882 = vpop.f32.mrf.mxu0
        %v1883 = vadd.f32 0.0, %v1882
        %v1884 = vpop.f32.mrf.mxu0
        %1885 = vmatprep.mubr.f32.mxu0 0.0
        %1886 = vmatmul.mubr.f32.gmra.mxu0 %v1479
        %v1887 = vpop.f32.mrf.mxu0
        %v1888 = vadd.f32 0.0, %v1887
        %v1889 = vpop.f32.mrf.mxu0
        %1890 = vmatprep.mubr.f32.mxu0 0.0
        %1891 = vmatmul.mubr.f32.gmra.mxu0 %v1480
        %v1892 = vpop.f32.mrf.mxu0
        %v1893 = vadd.f32 0.0, %v1892
        %v1894 = vpop.f32.mrf.mxu0
        %1895 = vmatprep.mubr.f32.mxu0 0.0
        %1896 = vmatmul.mubr.f32.gmra.mxu0 %v1481
        %v1897 = vpop.f32.mrf.mxu0
        %v1898 = vadd.f32 0.0, %v1897
        %v1899 = vpop.f32.mrf.mxu0
        %1900 = vmatprep.mubr.f32.mxu0 0.0
        %1901 = vmatmul.mubr.f32.gmra.mxu0 %v1482
        %v1902 = vpop.f32.mrf.mxu0
        %v1903 = vadd.f32 0.0, %v1902
        %v1904 = vpop.f32.mrf.mxu0
        %1905 = vmatprep.mubr.f32.mxu0 0.0
        %1906 = vmatmul.mubr.f32.gmra.mxu0 %v1483
        %v1907 = vpop.f32.mrf.mxu0
        %v1908 = vadd.f32 0.0, %v1907
        %v1909 = vpop.f32.mrf.mxu0
        %1910 = vmatprep.mubr.f32.mxu0 0.0
        %1911 = vmatmul.mubr.f32.gmra.mxu0 %v1484
        %v1912 = vpop.f32.mrf.mxu0
        %v1913 = vadd.f32 0.0, %v1912
        %v1914 = vpop.f32.mrf.mxu0
        %1915 = vmatprep.mubr.f32.mxu0 0.0
        %1916 = vmatmul.mubr.f32.gmra.mxu0 %v1485
        %v1917 = vpop.f32.mrf.mxu0
        %v1918 = vadd.f32 0.0, %v1917
        %v1919 = vpop.f32.mrf.mxu0
        %1920 = vmatprep.mubr.f32.mxu0 0.0
        %1921 = vmatmul.mubr.f32.gmra.mxu0 %v1486
        %v1922 = vpop.f32.mrf.mxu0
        %v1923 = vadd.f32 0.0, %v1922
        %v1924 = vpop.f32.mrf.mxu0
        %1925 = vmatprep.mubr.f32.mxu0 0.0
        %1926 = vmatmul.mubr.f32.gmra.mxu0 %v1487
        %v1927 = vpop.f32.mrf.mxu0
        %v1928 = vadd.f32 0.0, %v1927
        %v1929 = vpop.f32.mrf.mxu0
        %1930 = vmatprep.mubr.f32.mxu0 0.0
        %1931 = vmatmul.mubr.f32.gmra.mxu0 %v1488
        %v1932 = vpop.f32.mrf.mxu0
        %v1933 = vadd.f32 0.0, %v1932
        %v1934 = vpop.f32.mrf.mxu0
        %1935 = vmatprep.mubr.f32.mxu0 0.0
        %1936 = vmatmul.mubr.f32.gmra.mxu0 %v1489
        %v1937 = vpop.f32.mrf.mxu0
        %v1938 = vadd.f32 0.0, %v1937
        %v1939 = vpop.f32.mrf.mxu0
        %1940 = vdwg.mxu0
        %v1941 = vcvt.f32.s32.to.zero.pseudo %v1623
        %v1942 = vcvt.f32.s32.to.zero.pseudo %v1628
        %v1943 = vcvt.f32.s32.to.zero.pseudo %v1633
        %v1944 = vcvt.f32.s32.to.zero.pseudo %v1638
        %v1945 = vcvt.f32.s32.to.zero.pseudo %v1643
        %v1946 = vcvt.f32.s32.to.zero.pseudo %v1648
        %v1947 = vcvt.f32.s32.to.zero.pseudo %v1653
        %v1948 = vcvt.f32.s32.to.zero.pseudo %v1658
        %v1949 = vcvt.f32.s32.to.zero.pseudo %v1663
        %v1950 = vcvt.f32.s32.to.zero.pseudo %v1668
        %v1951 = vcvt.f32.s32.to.zero.pseudo %v1673
        %v1952 = vcvt.f32.s32.to.zero.pseudo %v1678
        %v1953 = vcvt.f32.s32.to.zero.pseudo %v1683
        %v1954 = vcvt.f32.s32.to.zero.pseudo %v1688
        %v1955 = vcvt.f32.s32.to.zero.pseudo %v1693
        %v1956 = vcvt.f32.s32.to.zero.pseudo %v1698
        %v1957 = vcvt.f32.s32.to.zero.pseudo %v1703
        %v1958 = vcvt.f32.s32.to.zero.pseudo %v1708
        %v1959 = vcvt.f32.s32.to.zero.pseudo %v1713
        %v1960 = vcvt.f32.s32.to.zero.pseudo %v1718
        %v1961 = vcvt.f32.s32.to.zero.pseudo %v1723
        %v1962 = vcvt.f32.s32.to.zero.pseudo %v1728
        %v1963 = vcvt.f32.s32.to.zero.pseudo %v1733
        %v1964 = vcvt.f32.s32.to.zero.pseudo %v1738
        %v1965 = vcvt.f32.s32.to.zero.pseudo %v1743
        %v1966 = vcvt.f32.s32.to.zero.pseudo %v1748
        %v1967 = vcvt.f32.s32.to.zero.pseudo %v1753
        %v1968 = vcvt.f32.s32.to.zero.pseudo %v1758
        %v1969 = vcvt.f32.s32.to.zero.pseudo %v1763
        %v1970 = vcvt.f32.s32.to.zero.pseudo %v1768
        %v1971 = vcvt.f32.s32.to.zero.pseudo %v1773
        %v1972 = vcvt.f32.s32.to.zero.pseudo %v1778
        %v1973 = vcvt.f32.s32.to.zero.pseudo %v1783
        %v1974 = vcvt.f32.s32.to.zero.pseudo %v1788
        %v1975 = vcvt.f32.s32.to.zero.pseudo %v1793
        %v1976 = vcvt.f32.s32.to.zero.pseudo %v1798
        %v1977 = vcvt.f32.s32.to.zero.pseudo %v1803
        %v1978 = vcvt.f32.s32.to.zero.pseudo %v1808
        %v1979 = vcvt.f32.s32.to.zero.pseudo %v1813
        %v1980 = vcvt.f32.s32.to.zero.pseudo %v1818
        %v1981 = vcvt.f32.s32.to.zero.pseudo %v1823
        %v1982 = vcvt.f32.s32.to.zero.pseudo %v1828
        %v1983 = vcvt.f32.s32.to.zero.pseudo %v1833
        %v1984 = vcvt.f32.s32.to.zero.pseudo %v1838
        %v1985 = vcvt.f32.s32.to.zero.pseudo %v1843
        %v1986 = vcvt.f32.s32.to.zero.pseudo %v1848
        %v1987 = vcvt.f32.s32.to.zero.pseudo %v1853
        %v1988 = vcvt.f32.s32.to.zero.pseudo %v1858
        %v1989 = vcvt.f32.s32.to.zero.pseudo %v1863
        %v1990 = vcvt.f32.s32.to.zero.pseudo %v1868
        %v1991 = vcvt.f32.s32.to.zero.pseudo %v1873
        %v1992 = vcvt.f32.s32.to.zero.pseudo %v1878
        %v1993 = vcvt.f32.s32.to.zero.pseudo %v1883
        %v1994 = vcvt.f32.s32.to.zero.pseudo %v1888
        %v1995 = vcvt.f32.s32.to.zero.pseudo %v1893
        %v1996 = vcvt.f32.s32.to.zero.pseudo %v1898
        %v1997 = vcvt.f32.s32.to.zero.pseudo %v1903
        %v1998 = vcvt.f32.s32.to.zero.pseudo %v1908
        %v1999 = vcvt.f32.s32.to.zero.pseudo %v1913
        %v2000 = vcvt.f32.s32.to.zero.pseudo %v1918
        %v2001 = vcvt.f32.s32.to.zero.pseudo %v1923
        %v2002 = vcvt.f32.s32.to.zero.pseudo %v1928
        %v2003 = vcvt.f32.s32.to.zero.pseudo %v1933
        %v2004 = vcvt.f32.s32.to.zero.pseudo %v1938
        %vm2005 = vcmask 130048
        %2006 = vst.msk [vmem:[%s137] sm:$0xff] %vm2005, %v1941
        %2007 = vst.msk [vmem:[%s137 + $0x8] sm:$0xff] %vm2005, %v1942
        %2008 = vst.msk [vmem:[%s137 + $0x10] sm:$0xff] %vm2005, %v1943
        %2009 = vst.msk [vmem:[%s137 + $0x18] sm:$0xff] %vm2005, %v1944
        %2010 = vst.msk [vmem:[%s137 + $0x20] sm:$0xff] %vm2005, %v1945
        %2011 = vst.msk [vmem:[%s137 + $0x28] sm:$0xff] %vm2005, %v1946
        %2012 = vst.msk [vmem:[%s137 + $0x30] sm:$0xff] %vm2005, %v1947
        %2013 = vst.msk [vmem:[%s137 + $0x38] sm:$0xff] %vm2005, %v1948
        %2014 = vst.msk [vmem:[%s137 + $0x40] sm:$0xff] %vm2005, %v1949
        %2015 = vst.msk [vmem:[%s137 + $0x48] sm:$0xff] %vm2005, %v1950
        %2016 = vst.msk [vmem:[%s137 + $0x50] sm:$0xff] %vm2005, %v1951
        %2017 = vst.msk [vmem:[%s137 + $0x58] sm:$0xff] %vm2005, %v1952
        %2018 = vst.msk [vmem:[%s137 + $0x60] sm:$0xff] %vm2005, %v1953
        %2019 = vst.msk [vmem:[%s137 + $0x68] sm:$0xff] %vm2005, %v1954
        %2020 = vst.msk [vmem:[%s137 + $0x70] sm:$0xff] %vm2005, %v1955
        %2021 = vst.msk [vmem:[%s137 + $0x78] sm:$0xff] %vm2005, %v1956
        %2022 = vst.msk [vmem:[%s137 + $0x80] sm:$0xff] %vm2005, %v1957
        %2023 = vst.msk [vmem:[%s137 + $0x88] sm:$0xff] %vm2005, %v1958
        %2024 = vst.msk [vmem:[%s137 + $0x90] sm:$0xff] %vm2005, %v1959
        %2025 = vst.msk [vmem:[%s137 + $0x98] sm:$0xff] %vm2005, %v1960
        %2026 = vst.msk [vmem:[%s137 + $0xa0] sm:$0xff] %vm2005, %v1961
        %2027 = vst.msk [vmem:[%s137 + $0xa8] sm:$0xff] %vm2005, %v1962
        %2028 = vst.msk [vmem:[%s137 + $0xb0] sm:$0xff] %vm2005, %v1963
        %2029 = vst.msk [vmem:[%s137 + $0xb8] sm:$0xff] %vm2005, %v1964
        %2030 = vst.msk [vmem:[%s137 + $0xc0] sm:$0xff] %vm2005, %v1965
        %2031 = vst.msk [vmem:[%s137 + $0xc8] sm:$0xff] %vm2005, %v1966
        %2032 = vst.msk [vmem:[%s137 + $0xd0] sm:$0xff] %vm2005, %v1967
        %2033 = vst.msk [vmem:[%s137 + $0xd8] sm:$0xff] %vm2005, %v1968
        %2034 = vst.msk [vmem:[%s137 + $0xe0] sm:$0xff] %vm2005, %v1969
        %2035 = vst.msk [vmem:[%s137 + $0xe8] sm:$0xff] %vm2005, %v1970
        %2036 = vst.msk [vmem:[%s137 + $0xf0] sm:$0xff] %vm2005, %v1971
        %2037 = vst.msk [vmem:[%s137 + $0xf8] sm:$0xff] %vm2005, %v1972
        %2038 = vst.msk [vmem:[%s137 + $0x100] sm:$0xff] %vm2005, %v1973
        %2039 = vst.msk [vmem:[%s137 + $0x108] sm:$0xff] %vm2005, %v1974
        %2040 = vst.msk [vmem:[%s137 + $0x110] sm:$0xff] %vm2005, %v1975
        %2041 = vst.msk [vmem:[%s137 + $0x118] sm:$0xff] %vm2005, %v1976
        %2042 = vst.msk [vmem:[%s137 + $0x120] sm:$0xff] %vm2005, %v1977
        %2043 = vst.msk [vmem:[%s137 + $0x128] sm:$0xff] %vm2005, %v1978
        %2044 = vst.msk [vmem:[%s137 + $0x130] sm:$0xff] %vm2005, %v1979
        %2045 = vst.msk [vmem:[%s137 + $0x138] sm:$0xff] %vm2005, %v1980
        %2046 = vst.msk [vmem:[%s137 + $0x140] sm:$0xff] %vm2005, %v1981
        %2047 = vst.msk [vmem:[%s137 + $0x148] sm:$0xff] %vm2005, %v1982
        %2048 = vst.msk [vmem:[%s137 + $0x150] sm:$0xff] %vm2005, %v1983
        %2049 = vst.msk [vmem:[%s137 + $0x158] sm:$0xff] %vm2005, %v1984
        %2050 = vst.msk [vmem:[%s137 + $0x160] sm:$0xff] %vm2005, %v1985
        %2051 = vst.msk [vmem:[%s137 + $0x168] sm:$0xff] %vm2005, %v1986
        %2052 = vst.msk [vmem:[%s137 + $0x170] sm:$0xff] %vm2005, %v1987
        %2053 = vst.msk [vmem:[%s137 + $0x178] sm:$0xff] %vm2005, %v1988
        %2054 = vst.msk [vmem:[%s137 + $0x180] sm:$0xff] %vm2005, %v1989
        %2055 = vst.msk [vmem:[%s137 + $0x188] sm:$0xff] %vm2005, %v1990
        %2056 = vst.msk [vmem:[%s137 + $0x190] sm:$0xff] %vm2005, %v1991
        %2057 = vst.msk [vmem:[%s137 + $0x198] sm:$0xff] %vm2005, %v1992
        %2058 = vst.msk [vmem:[%s137 + $0x1a0] sm:$0xff] %vm2005, %v1993
        %2059 = vst.msk [vmem:[%s137 + $0x1a8] sm:$0xff] %vm2005, %v1994
        %2060 = vst.msk [vmem:[%s137 + $0x1b0] sm:$0xff] %vm2005, %v1995
        %2061 = vst.msk [vmem:[%s137 + $0x1b8] sm:$0xff] %vm2005, %v1996
        %2062 = vst.msk [vmem:[%s137 + $0x1c0] sm:$0xff] %vm2005, %v1997
        %2063 = vst.msk [vmem:[%s137 + $0x1c8] sm:$0xff] %vm2005, %v1998
        %2064 = vst.msk [vmem:[%s137 + $0x1d0] sm:$0xff] %vm2005, %v1999
        %2065 = vst.msk [vmem:[%s137 + $0x1d8] sm:$0xff] %vm2005, %v2000
        %2066 = vst.msk [vmem:[%s137 + $0x1e0] sm:$0xff] %vm2005, %v2001
        %2067 = vst.msk [vmem:[%s137 + $0x1e8] sm:$0xff] %vm2005, %v2002
        %2068 = vst.msk [vmem:[%s137 + $0x1f0] sm:$0xff] %vm2005, %v2003
        %2069 = vst.msk [vmem:[%s137 + $0x1f8] sm:$0xff] %vm2005, %v2004
        %s2070 = smul.u32 64, %s15
        %p2071 = scmp.lt.s32.totalorder %s2070, 127
        %s2072 = scalar_select %p2071, %s2070, 127
        %s2073 = smul.addr %s2072, 8
        %s2074 = scalar_lea.vmem %s1, %s2073
        // Predicated region
        $region29: #{tpu_custom_call.1} parent=23 // pred_check
          %p2075 = pneg %p59
        $region30: #{tpu_custom_call.1} parent=23 // pred_check_branch
          %2077 = sbr.rel (%p2075) target = $region32
        $region31: #{tpu_custom_call.1} parent=23 // pred_region
          %s2078 = smul.u32 64, %s15
        $region32: #{tpu_custom_call.1} parent=23 // pred_fallthru
          _
      $region24: #{tpu_custom_call.1} parent=5 // pred_fallthru
        _
      %p2079 = scmp.le.s32.totalorder 2, %s10
      // Predicated region
      $region33: #{tpu_custom_call.1} parent=5 // pred_check
        %p2080 = pneg %p2079
      $region34: #{tpu_custom_call.1} parent=5 // pred_check_branch
        %2082 = sbr.rel (%p2080) target = $region36
      $region35: #{tpu_custom_call.1} parent=5 // pred_region
        %s2083 = ssub.s32 %s10, 2
        // Predicated region
        $region37: #{tpu_custom_call.1} parent=35 // pred_check
          %p2084 = pneg %p65
        $region38: #{tpu_custom_call.1} parent=35 // pred_check_branch
          %2086 = sbr.rel (%p2084) target = $region40
        $region39: #{tpu_custom_call.1} parent=35 // pred_region
          %s2087 = smul.u32 64, %s16
          %p2088 = scmp.lt.s32.totalorder %s2087, 127
          %s2089 = scalar_select %p2088, %s2087, 127
          %s2090 = smul.addr %s2089, 8
          %s2091 = scalar_lea.vmem %s1, %s2090
        $region40: #{tpu_custom_call.1} parent=35 // pred_fallthru
          _
      $region36: #{tpu_custom_call.1} parent=5 // pred_fallthru
        _
    $region6: #{tpu_custom_call.1} parent=1 // loop_footer
      %s14 = sadd.s32 1, %s10
    $region7: #{tpu_custom_call.1} parent=1 // loop_footer_branch
      %9 = sbr.rel target = $region3
    $region8: #{tpu_custom_call.1} parent=1 // loop_exit
      _
    %2092 = vsyncpa [#allocation3], 1
    %s2093 = scalar_lea.sflag [#allocation3], 1
    %2094 = vsyncpa %s2093, 1

</llo_original>
